<compile_context>
chip_gen: v6e
topology: v6e:2x2x1
jax: 0.10.0
libtpu: 0.0.40
codegen_flags: <defaults>
</compile_context>

<pallas_src>
import numpy as np
import jax
import jax.numpy as jnp
from jax.experimental import pallas as pl
from jax.experimental.pallas import tpu as pltpu

WEIGHT_REG = 1e-6
DROPOUT_REG = 1e-5
EPS = 1e-7

D_IN, H1, H2, D_OUT = 784, 400, 600, 10
D_OUT_PAD = 128          # lane-dense padded output width (sliced back to 10)
B_TILE_CAP = 512         # max batch rows per grid step


def _round_up(x, m):
    return ((x + m - 1) // m) * m


def _mlp_concrete_dropout_kernel(
    scal_ref,                                                   # SMEM scalars
    x_ref, u1_ref, u2_ref, u3_ref,                              # batch-tiled
    w1_ref, b1_ref, w2_ref, b2_ref, w3_ref, b3_ref,             # resident
    out_ref,
):
    eps = jnp.float32(EPS)
    half_inv_temp = jnp.float32(5.0)   # 1 / (2 * temp), temp = 0.1

    def _layer(h_bf16, w_ref, b_ref, u, a, inv_keep):
        # linear: y = h @ W_t + b   (bf16 MXU, f32 accumulation, f32 bias add)
        y = jnp.dot(h_bf16, w_ref[...],
                    preferred_element_type=jnp.float32) + b_ref[...]
        # Concrete dropout applied to the linear OUTPUT (as in the PyTorch Model):
        #   logit = log(p+eps) - log(1-p+eps) + log(u+eps) - log(1-u+eps)
        #   keep  = 1 - sigmoid(logit / temp) = 0.5 - 0.5 * tanh(logit / (2*temp))
        logit = a + jnp.log((u + eps) / (1.0 - u + eps))
        keep = 0.5 - 0.5 * jnp.tanh(logit * half_inv_temp)
        # y * keep / (1 - p), then ReLU (ReLU follows each conc_drop in forward)
        return jnp.maximum(y * keep * inv_keep, 0.0)

    a1, k1 = scal_ref[0], scal_ref[1]
    a2, k2 = scal_ref[2], scal_ref[3]
    a3, k3 = scal_ref[4], scal_ref[5]

    h1 = _layer(x_ref[...], w1_ref, b1_ref, u1_ref[...], a1, k1)
    h2 = _layer(h1.astype(jnp.bfloat16), w2_ref, b2_ref, u2_ref[...], a2, k2)
    h3 = _layer(h2.astype(jnp.bfloat16), w3_ref, b3_ref, u3_ref[...], a3, k3)

    # log_softmax over the 10 real classes; padded lanes masked so they
    # contribute exp(-inf) ~ 0 to the normalizer (their outputs are discarded).
    col = jax.lax.broadcasted_iota(jnp.int32, h3.shape, 1)
    masked = jnp.where(col < D_OUT, h3, jnp.float32(-1e30))
    m = jnp.max(masked, axis=1, keepdims=True)
    lse = jnp.log(jnp.sum(jnp.exp(masked - m), axis=1, keepdims=True)) + m
    out_ref[...] = masked - lse


def init_params(key):
    ks = jax.random.split(key, 9)

    def linear(kw, kb, fan_in, fan_out, pad_out=None):
        bound = 1.0 / np.sqrt(fan_in)
        # stored transposed: (in, out); torch nn.Linear-style uniform init
        w_t = jax.random.uniform(kw, (fan_in, fan_out), jnp.float32, -bound, bound)
        b = jax.random.uniform(kb, (1, fan_out), jnp.float32, -bound, bound)
        # sum of squared parameters (weight + bias, from the f32 master copy)
        ssq = jnp.sum(w_t * w_t) + jnp.sum(b * b)
        if pad_out is not None and pad_out > fan_out:
            w_t = jnp.pad(w_t, ((0, 0), (0, pad_out - fan_out)))
            b = jnp.pad(b, ((0, 0), (0, pad_out - fan_out)))
        return w_t.astype(jnp.bfloat16), b, ssq

    w1, b1, ssq1 = linear(ks[0], ks[1], D_IN, H1)
    w2, b2, ssq2 = linear(ks[2], ks[3], H1, H2)
    w3, b3, ssq3 = linear(ks[4], ks[5], H2, D_OUT, pad_out=D_OUT_PAD)

    init_min = float(np.log(0.1) - np.log(0.9))
    init_max = float(np.log(0.9) - np.log(0.1))
    pl1 = jax.random.uniform(ks[6], (1,), jnp.float32, init_min, init_max)
    pl2 = jax.random.uniform(ks[7], (1,), jnp.float32, init_min, init_max)
    pl3 = jax.random.uniform(ks[8], (1,), jnp.float32, init_min, init_max)
    return dict(w1=w1, b1=b1, w2=w2, b2=b2, w3=w3, b3=b3,
                ssq1=ssq1, ssq2=ssq2, ssq3=ssq3,
                pl1=pl1, pl2=pl2, pl3=pl3)


def model_forward(x, params, noise_key):
    B = x.shape[0]
    xf = x.reshape(B, D_IN).astype(jnp.float32)

    # Batch tiling derived from B: sublane-multiple-of-8 tile, <=512 rows,
    # with at most 7 padded rows per tile.
    n_tiles = -(-B // B_TILE_CAP)
    b_tile = _round_up(-(-B // n_tiles), 8)
    b_pad = b_tile * n_tiles
    if b_pad != B:
        xf = jnp.pad(xf, ((0, b_pad - B), (0, 0)))
    x_bf = xf.astype(jnp.bfloat16)

    # Dropout uniforms (torch.rand_like equivalents), generated wrapper-side.
    ku1, ku2, ku3 = jax.random.split(noise_key, 3)
    u1 = jax.random.uniform(ku1, (b_pad, H1), jnp.float32)
    u2 = jax.random.uniform(ku2, (b_pad, H2), jnp.float32)
    u3 = jax.random.uniform(ku3, (b_pad, D_OUT_PAD), jnp.float32)

    # Batch-independent dropout scalars (tiny, wrapper-side).
    def drop_scalars(p_logit):
        p = jax.nn.sigmoid(p_logit[0])
        a = jnp.log(p + EPS) - jnp.log(1.0 - p + EPS)
        inv_keep = 1.0 / (1.0 - p)
        return p, a, inv_keep

    p1, a1, k1 = drop_scalars(params["pl1"])
    p2, a2, k2 = drop_scalars(params["pl2"])
    p3, a3, k3 = drop_scalars(params["pl3"])
    scal = jnp.stack([a1, k1, a2, k2, a3, k3,
                      jnp.zeros((), jnp.float32),
                      jnp.zeros((), jnp.float32)]).astype(jnp.float32)

    grid_spec = pltpu.PrefetchScalarGridSpec(
        num_scalar_prefetch=0,
        grid=(n_tiles,),
        in_specs=[
            pl.BlockSpec(memory_space=pltpu.MemorySpace.SMEM),     # dropout scalars
            pl.BlockSpec((b_tile, D_IN), lambda i: (i, 0)),        # x tile
            pl.BlockSpec((b_tile, H1), lambda i: (i, 0)),          # noise 1
            pl.BlockSpec((b_tile, H2), lambda i: (i, 0)),          # noise 2
            pl.BlockSpec((b_tile, D_OUT_PAD), lambda i: (i, 0)),   # noise 3
            pl.BlockSpec((D_IN, H1), lambda i: (0, 0)),            # resident weights
            pl.BlockSpec((1, H1), lambda i: (0, 0)),
            pl.BlockSpec((H1, H2), lambda i: (0, 0)),
            pl.BlockSpec((1, H2), lambda i: (0, 0)),
            pl.BlockSpec((H2, D_OUT_PAD), lambda i: (0, 0)),
            pl.BlockSpec((1, D_OUT_PAD), lambda i: (0, 0)),
        ],
        out_specs=pl.BlockSpec((b_tile, D_OUT_PAD), lambda i: (i, 0)),
    )

    out_pad = pl.pallas_call(
        _mlp_concrete_dropout_kernel,
        out_shape=jax.ShapeDtypeStruct((b_pad, D_OUT_PAD), jnp.float32),
        grid_spec=grid_spec,
        compiler_params=pltpu.CompilerParams(
            dimension_semantics=("parallel",),      # megacore-shard the batch axis
            vmem_limit_bytes=48 << 20,              # headroom for 512-row tiles, v7x-safe
        ),
    )(scal, x_bf, u1, u2, u3,
      params["w1"], params["b1"],
      params["w2"], params["b2"],
      params["w3"], params["b3"])

    log_probs = out_pad[:B, :D_OUT]

    # Regularization exactly as in the PyTorch module:
    #   weight_reg * sum(W^2 + b^2) / (1 - p)
    # + [p*log(p) + (1-p)*log(1-p)] * dropout_reg * input_dimensionality
    # where input_dimensionality is the per-sample size of the tensor passed to
    # ConcreteDropout (the linear OUTPUT: 400 / 600 / 10).
    def reg(ssq, p, out_dim):
        wreg = WEIGHT_REG * ssq / (1.0 - p)
        ent = p * jnp.log(p) + (1.0 - p) * jnp.log(1.0 - p)
        return wreg + ent * (DROPOUT_REG * out_dim)

    reg_sum = (reg(params["ssq1"], p1, H1)
               + reg(params["ssq2"], p2, H2)
               + reg(params["ssq3"], p3, D_OUT))
    return log_probs, reg_sum


if __name__ == "__main__":
    key = jax.random.PRNGKey(0)
    k_param, k_input, k_noise = jax.random.split(key, 3)

    params = init_params(k_param)
    # MNIST-shaped input, small batch
    x = jax.random.uniform(k_input, (2, 1, 28, 28), jnp.float32)

    log_probs, reg_sum = model_forward(x, params, k_noise)
    jax.block_until_ready(log_probs)
    jax.block_until_ready(reg_sum)

    assert log_probs.shape == (2, D_OUT)
    assert reg_sum.shape == ()
    assert bool(jnp.all(jnp.isfinite(log_probs)))
    assert bool(jnp.isfinite(reg_sum))
    row_sums = jnp.exp(log_probs).sum(axis=1)
    assert bool(jnp.all(jnp.abs(row_sums - 1.0) < 1e-3))
    print("KERNEL_OK")
</pallas_src>

<mosaic_0001>
module attributes {stable_mosaic.version = 11 : i64} {
  func.func @_mlp_concrete_dropout_kernel(%arg0: i32, %arg1: memref<8xf32, #tpu.memory_space<smem>>, %arg2: memref<8x784xbf16, #tpu.memory_space<vmem>>, %arg3: memref<8x400xf32, #tpu.memory_space<vmem>>, %arg4: memref<8x600xf32, #tpu.memory_space<vmem>>, %arg5: memref<8x128xf32, #tpu.memory_space<vmem>>, %arg6: memref<784x400xbf16, #tpu.memory_space<vmem>>, %arg7: memref<1x400xf32, #tpu.memory_space<vmem>>, %arg8: memref<400x600xbf16, #tpu.memory_space<vmem>>, %arg9: memref<1x600xf32, #tpu.memory_space<vmem>>, %arg10: memref<600x128xbf16, #tpu.memory_space<vmem>>, %arg11: memref<1x128xf32, #tpu.memory_space<vmem>>, %arg12: memref<8x128xf32, #tpu.memory_space<vmem>>) attributes {dimension_semantics = [#tpu.dimension_semantics<parallel>], iteration_bounds = array<i64: 1>, scalar_prefetch = 0 : i64, scratch_operands = 0 : i64, tpu.core_type = #tpu.core_type<tc>, window_params = [{transform_indices = @transform_0, window_bounds = array<i64: 8>}, {transform_indices = @transform_1, window_bounds = array<i64: 8, 784>}, {transform_indices = @transform_2, window_bounds = array<i64: 8, 400>}, {transform_indices = @transform_3, window_bounds = array<i64: 8, 600>}, {transform_indices = @transform_4, window_bounds = array<i64: 8, 128>}, {pipeline_mode = #tpu.pipeline_mode<synchronous>, transform_indices = @transform_5, window_bounds = array<i64: 784, 400>}, {pipeline_mode = #tpu.pipeline_mode<synchronous>, transform_indices = @transform_6, window_bounds = array<i64: 1, 400>}, {pipeline_mode = #tpu.pipeline_mode<synchronous>, transform_indices = @transform_7, window_bounds = array<i64: 400, 600>}, {pipeline_mode = #tpu.pipeline_mode<synchronous>, transform_indices = @transform_8, window_bounds = array<i64: 1, 600>}, {pipeline_mode = #tpu.pipeline_mode<synchronous>, transform_indices = @transform_9, window_bounds = array<i64: 600, 128>}, {pipeline_mode = #tpu.pipeline_mode<synchronous>, transform_indices = @transform_10, window_bounds = array<i64: 1, 128>}, {transform_indices = @transform_11, window_bounds = array<i64: 8, 128>}]} {
    %c0 = arith.constant 0 : index
    %0 = memref.load %arg1[%c0] : memref<8xf32, #tpu.memory_space<smem>>
    %c1 = arith.constant 1 : index
    %1 = memref.load %arg1[%c1] : memref<8xf32, #tpu.memory_space<smem>>
    %c2 = arith.constant 2 : index
    %2 = memref.load %arg1[%c2] : memref<8xf32, #tpu.memory_space<smem>>
    %c3 = arith.constant 3 : index
    %3 = memref.load %arg1[%c3] : memref<8xf32, #tpu.memory_space<smem>>
    %c4 = arith.constant 4 : index
    %4 = memref.load %arg1[%c4] : memref<8xf32, #tpu.memory_space<smem>>
    %c5 = arith.constant 5 : index
    %5 = memref.load %arg1[%c5] : memref<8xf32, #tpu.memory_space<smem>>
    %c0_0 = arith.constant 0 : index
    %c0_1 = arith.constant 0 : index
    %6 = vector.load %arg2[%c0_0, %c0_1] : memref<8x784xbf16, #tpu.memory_space<vmem>>, vector<8x784xbf16>
    %c0_2 = arith.constant 0 : index
    %c0_3 = arith.constant 0 : index
    %7 = vector.load %arg3[%c0_2, %c0_3] : memref<8x400xf32, #tpu.memory_space<vmem>>, vector<8x400xf32>
    %c0_4 = arith.constant 0 : index
    %c0_5 = arith.constant 0 : index
    %8 = vector.load %arg6[%c0_4, %c0_5] : memref<784x400xbf16, #tpu.memory_space<vmem>>, vector<784x400xbf16>
    %cst = arith.constant dense<0.000000e+00> : vector<8x400xf32>
    %9 = tpu.matmul %6, %8, %cst {dimension_numbers = #tpu.dot_dimension_numbers<[1], [0], [0], [1], [0, 0, 1, 1], [], []>} : vector<8x784xbf16>, vector<784x400xbf16>, vector<8x400xf32> -> vector<8x400xf32>
    %c0_6 = arith.constant 0 : index
    %c0_7 = arith.constant 0 : index
    %10 = vector.load %arg7[%c0_6, %c0_7] : memref<1x400xf32, #tpu.memory_space<vmem>>, vector<1x400xf32>
    %11 = vector.broadcast %10 : vector<1x400xf32> to vector<8x400xf32>
    %12 = arith.addf %9, %11 : vector<8x400xf32>
    %cst_8 = arith.constant 1.000000e-07 : f32
    %13 = vector.broadcast %cst_8 : f32 to vector<8x400xf32>
    %14 = arith.addf %7, %13 : vector<8x400xf32>
    %cst_9 = arith.constant 1.000000e+00 : f32
    %15 = vector.broadcast %cst_9 : f32 to vector<8x400xf32>
    %16 = arith.subf %15, %7 : vector<8x400xf32>
    %cst_10 = arith.constant 1.000000e-07 : f32
    %17 = vector.broadcast %cst_10 : f32 to vector<8x400xf32>
    %18 = arith.addf %16, %17 : vector<8x400xf32>
    %19 = arith.divf %14, %18 : vector<8x400xf32>
    %20 = math.log %19 : vector<8x400xf32>
    %21 = vector.broadcast %0 : f32 to vector<8x400xf32>
    %22 = arith.addf %21, %20 : vector<8x400xf32>
    %cst_11 = arith.constant 5.000000e+00 : f32
    %23 = vector.broadcast %cst_11 : f32 to vector<8x400xf32>
    %24 = arith.mulf %22, %23 : vector<8x400xf32>
    %25 = math.tanh %24 : vector<8x400xf32>
    %cst_12 = arith.constant 5.000000e-01 : f32
    %26 = vector.broadcast %cst_12 : f32 to vector<8x400xf32>
    %27 = arith.mulf %26, %25 : vector<8x400xf32>
    %cst_13 = arith.constant 5.000000e-01 : f32
    %28 = vector.broadcast %cst_13 : f32 to vector<8x400xf32>
    %29 = arith.subf %28, %27 : vector<8x400xf32>
    %30 = arith.mulf %12, %29 : vector<8x400xf32>
    %31 = vector.broadcast %1 : f32 to vector<8x400xf32>
    %32 = arith.mulf %30, %31 : vector<8x400xf32>
    %cst_14 = arith.constant 0.000000e+00 : f32
    %33 = vector.broadcast %cst_14 : f32 to vector<8x400xf32>
    %34 = arith.maximumf %32, %33 : vector<8x400xf32>
    %35 = arith.truncf %34 : vector<8x400xf32> to vector<8x400xbf16>
    %c0_15 = arith.constant 0 : index
    %c0_16 = arith.constant 0 : index
    %36 = vector.load %arg4[%c0_15, %c0_16] : memref<8x600xf32, #tpu.memory_space<vmem>>, vector<8x600xf32>
    %c0_17 = arith.constant 0 : index
    %c0_18 = arith.constant 0 : index
    %37 = vector.load %arg8[%c0_17, %c0_18] : memref<400x600xbf16, #tpu.memory_space<vmem>>, vector<400x600xbf16>
    %cst_19 = arith.constant dense<0.000000e+00> : vector<8x600xf32>
    %38 = tpu.matmul %35, %37, %cst_19 {dimension_numbers = #tpu.dot_dimension_numbers<[1], [0], [0], [1], [0, 0, 1, 1], [], []>} : vector<8x400xbf16>, vector<400x600xbf16>, vector<8x600xf32> -> vector<8x600xf32>
    %c0_20 = arith.constant 0 : index
    %c0_21 = arith.constant 0 : index
    %39 = vector.load %arg9[%c0_20, %c0_21] : memref<1x600xf32, #tpu.memory_space<vmem>>, vector<1x600xf32>
    %40 = vector.broadcast %39 : vector<1x600xf32> to vector<8x600xf32>
    %41 = arith.addf %38, %40 : vector<8x600xf32>
    %cst_22 = arith.constant 1.000000e-07 : f32
    %42 = vector.broadcast %cst_22 : f32 to vector<8x600xf32>
    %43 = arith.addf %36, %42 : vector<8x600xf32>
    %cst_23 = arith.constant 1.000000e+00 : f32
    %44 = vector.broadcast %cst_23 : f32 to vector<8x600xf32>
    %45 = arith.subf %44, %36 : vector<8x600xf32>
    %cst_24 = arith.constant 1.000000e-07 : f32
    %46 = vector.broadcast %cst_24 : f32 to vector<8x600xf32>
    %47 = arith.addf %45, %46 : vector<8x600xf32>
    %48 = arith.divf %43, %47 : vector<8x600xf32>
    %49 = math.log %48 : vector<8x600xf32>
    %50 = vector.broadcast %2 : f32 to vector<8x600xf32>
    %51 = arith.addf %50, %49 : vector<8x600xf32>
    %cst_25 = arith.constant 5.000000e+00 : f32
    %52 = vector.broadcast %cst_25 : f32 to vector<8x600xf32>
    %53 = arith.mulf %51, %52 : vector<8x600xf32>
    %54 = math.tanh %53 : vector<8x600xf32>
    %cst_26 = arith.constant 5.000000e-01 : f32
    %55 = vector.broadcast %cst_26 : f32 to vector<8x600xf32>
    %56 = arith.mulf %55, %54 : vector<8x600xf32>
    %cst_27 = arith.constant 5.000000e-01 : f32
    %57 = vector.broadcast %cst_27 : f32 to vector<8x600xf32>
    %58 = arith.subf %57, %56 : vector<8x600xf32>
    %59 = arith.mulf %41, %58 : vector<8x600xf32>
    %60 = vector.broadcast %3 : f32 to vector<8x600xf32>
    %61 = arith.mulf %59, %60 : vector<8x600xf32>
    %cst_28 = arith.constant 0.000000e+00 : f32
    %62 = vector.broadcast %cst_28 : f32 to vector<8x600xf32>
    %63 = arith.maximumf %61, %62 : vector<8x600xf32>
    %64 = arith.truncf %63 : vector<8x600xf32> to vector<8x600xbf16>
    %c0_29 = arith.constant 0 : index
    %c0_30 = arith.constant 0 : index
    %65 = vector.load %arg5[%c0_29, %c0_30] : memref<8x128xf32, #tpu.memory_space<vmem>>, vector<8x128xf32>
    %c0_31 = arith.constant 0 : index
    %c0_32 = arith.constant 0 : index
    %66 = vector.load %arg10[%c0_31, %c0_32] : memref<600x128xbf16, #tpu.memory_space<vmem>>, vector<600x128xbf16>
    %cst_33 = arith.constant dense<0.000000e+00> : vector<8x128xf32>
    %67 = tpu.matmul %64, %66, %cst_33 {dimension_numbers = #tpu.dot_dimension_numbers<[1], [0], [0], [1], [0, 0, 1, 1], [], []>} : vector<8x600xbf16>, vector<600x128xbf16>, vector<8x128xf32> -> vector<8x128xf32>
    %c0_34 = arith.constant 0 : index
    %c0_35 = arith.constant 0 : index
    %68 = vector.load %arg11[%c0_34, %c0_35] : memref<1x128xf32, #tpu.memory_space<vmem>>, vector<1x128xf32>
    %69 = vector.broadcast %68 : vector<1x128xf32> to vector<8x128xf32>
    %70 = arith.addf %67, %69 : vector<8x128xf32>
    %cst_36 = arith.constant 1.000000e-07 : f32
    %71 = vector.broadcast %cst_36 : f32 to vector<8x128xf32>
    %72 = arith.addf %65, %71 : vector<8x128xf32>
    %cst_37 = arith.constant 1.000000e+00 : f32
    %73 = vector.broadcast %cst_37 : f32 to vector<8x128xf32>
    %74 = arith.subf %73, %65 : vector<8x128xf32>
    %cst_38 = arith.constant 1.000000e-07 : f32
    %75 = vector.broadcast %cst_38 : f32 to vector<8x128xf32>
    %76 = arith.addf %74, %75 : vector<8x128xf32>
    %77 = arith.divf %72, %76 : vector<8x128xf32>
    %78 = math.log %77 : vector<8x128xf32>
    %79 = vector.broadcast %4 : f32 to vector<8x128xf32>
    %80 = arith.addf %79, %78 : vector<8x128xf32>
    %cst_39 = arith.constant 5.000000e+00 : f32
    %81 = vector.broadcast %cst_39 : f32 to vector<8x128xf32>
    %82 = arith.mulf %80, %81 : vector<8x128xf32>
    %83 = math.tanh %82 : vector<8x128xf32>
    %cst_40 = arith.constant 5.000000e-01 : f32
    %84 = vector.broadcast %cst_40 : f32 to vector<8x128xf32>
    %85 = arith.mulf %84, %83 : vector<8x128xf32>
    %cst_41 = arith.constant 5.000000e-01 : f32
    %86 = vector.broadcast %cst_41 : f32 to vector<8x128xf32>
    %87 = arith.subf %86, %85 : vector<8x128xf32>
    %88 = arith.mulf %70, %87 : vector<8x128xf32>
    %89 = vector.broadcast %5 : f32 to vector<8x128xf32>
    %90 = arith.mulf %88, %89 : vector<8x128xf32>
    %cst_42 = arith.constant 0.000000e+00 : f32
    %91 = vector.broadcast %cst_42 : f32 to vector<8x128xf32>
    %92 = arith.maximumf %90, %91 : vector<8x128xf32>
    %93 = tpu.iota {dimensions = array<i32: 1>} : vector<8x128xi32>
    %c10_i32 = arith.constant 10 : i32
    %94 = vector.broadcast %c10_i32 : i32 to vector<8x128xi32>
    %95 = arith.cmpi slt, %93, %94 : vector<8x128xi32>
    %cst_43 = arith.constant -1.000000e+30 : f32
    %96 = vector.broadcast %cst_43 : f32 to vector<8x128xf32>
    %97 = arith.select %95, %92, %96 : vector<8x128xi1>, vector<8x128xf32>
    %cst_44 = arith.constant dense<0xFF800000> : vector<8xf32>
    %98 = vector.multi_reduction <maximumf>, %97, %cst_44 [1] : vector<8x128xf32> to vector<8xf32>
    %99 = vector.shape_cast %98 : vector<8xf32> to vector<8x1xf32>
    %100 = vector.broadcast %99 : vector<8x1xf32> to vector<8x128xf32>
    %101 = arith.subf %97, %100 : vector<8x128xf32>
    %102 = math.exp %101 : vector<8x128xf32>
    %cst_45 = arith.constant dense<0.000000e+00> : vector<8xf32>
    %103 = vector.multi_reduction <add>, %102, %cst_45 [1] : vector<8x128xf32> to vector<8xf32>
    %104 = vector.shape_cast %103 : vector<8xf32> to vector<8x1xf32>
    %105 = math.log %104 : vector<8x1xf32>
    %106 = arith.addf %105, %99 : vector<8x1xf32>
    %107 = vector.broadcast %106 : vector<8x1xf32> to vector<8x128xf32>
    %108 = arith.subf %97, %107 : vector<8x128xf32>
    %c0_46 = arith.constant 0 : index
    %c0_47 = arith.constant 0 : index
    %109 = vector.load %arg12[%c0_46, %c0_47] : memref<8x128xf32, #tpu.memory_space<vmem>>, vector<8x128xf32>
    tpu.vector_store %arg12[%c0_46, %c0_47], %108 {strides = array<i32>} : memref<8x128xf32, #tpu.memory_space<vmem>>, vector<8x128xf32>,
    return
  }
  func.func @transform_0(%arg0: i32) -> i32 {
    %c0_i32 = arith.constant 0 : i32
    %c0_i32_0 = arith.constant 0 : i32
    return %c0_i32 : i32
  }
  func.func @transform_1(%arg0: i32) -> (i32, i32) {
    %c0_i32 = arith.constant 0 : i32
    %c0_i32_0 = arith.constant 0 : i32
    return %arg0, %c0_i32 : i32, i32
  }
  func.func @transform_2(%arg0: i32) -> (i32, i32) {
    %c0_i32 = arith.constant 0 : i32
    %c0_i32_0 = arith.constant 0 : i32
    return %arg0, %c0_i32 : i32, i32
  }
  func.func @transform_3(%arg0: i32) -> (i32, i32) {
    %c0_i32 = arith.constant 0 : i32
    %c0_i32_0 = arith.constant 0 : i32
    return %arg0, %c0_i32 : i32, i32
  }
  func.func @transform_4(%arg0: i32) -> (i32, i32) {
    %c0_i32 = arith.constant 0 : i32
    %c0_i32_0 = arith.constant 0 : i32
    return %arg0, %c0_i32 : i32, i32
  }
  func.func @transform_5(%arg0: i32) -> (i32, i32) {
    %c0_i32 = arith.constant 0 : i32
    %c0_i32_0 = arith.constant 0 : i32
    %c0_i32_1 = arith.constant 0 : i32
    return %c0_i32, %c0_i32_0 : i32, i32
  }
  func.func @transform_6(%arg0: i32) -> (i32, i32) {
    %c0_i32 = arith.constant 0 : i32
    %c0_i32_0 = arith.constant 0 : i32
    %c0_i32_1 = arith.constant 0 : i32
    return %c0_i32, %c0_i32_0 : i32, i32
  }
  func.func @transform_7(%arg0: i32) -> (i32, i32) {
    %c0_i32 = arith.constant 0 : i32
    %c0_i32_0 = arith.constant 0 : i32
    %c0_i32_1 = arith.constant 0 : i32
    return %c0_i32, %c0_i32_0 : i32, i32
  }
  func.func @transform_8(%arg0: i32) -> (i32, i32) {
    %c0_i32 = arith.constant 0 : i32
    %c0_i32_0 = arith.constant 0 : i32
    %c0_i32_1 = arith.constant 0 : i32
    return %c0_i32, %c0_i32_0 : i32, i32
  }
  func.func @transform_9(%arg0: i32) -> (i32, i32) {
    %c0_i32 = arith.constant 0 : i32
    %c0_i32_0 = arith.constant 0 : i32
    %c0_i32_1 = arith.constant 0 : i32
    return %c0_i32, %c0_i32_0 : i32, i32
  }
  func.func @transform_10(%arg0: i32) -> (i32, i32) {
    %c0_i32 = arith.constant 0 : i32
    %c0_i32_0 = arith.constant 0 : i32
    %c0_i32_1 = arith.constant 0 : i32
    return %c0_i32, %c0_i32_0 : i32, i32
  }
  func.func @transform_11(%arg0: i32) -> (i32, i32) {
    %c0_i32 = arith.constant 0 : i32
    %c0_i32_0 = arith.constant 0 : i32
    return %arg0, %c0_i32 : i32, i32
  }
}

</mosaic_0001>

<llo_original>
// kernel: tpu_custom_call.1
$region0: #{tpu_custom_call.1}
  #allocation0 [shape = 'u32[]', space=smem, size = 0x4, offset = 0x4, fixed_abs, tag = 'smem constant byte address 0x4 - core index']
  #allocation1 [shape = 'u32[144,128]{1,0:T(1,128)}', space=vmem, size = 0x12000, scoped, tag = 'internal scratch']
  %s0 = inlined_call_operand.vmem [shape: f32[8], index: 0, kind: input, shape index: {}]
  %s1 = inlined_call_operand.vmem [shape: bf16[8,784], index: 1, kind: input, shape index: {}]
  %s2 = inlined_call_operand.vmem [shape: f32[8,400], index: 2, kind: input, shape index: {}]
  %s3 = inlined_call_operand.vmem [shape: f32[8,600], index: 3, kind: input, shape index: {}]
  %s4 = inlined_call_operand.vmem [shape: f32[8,128], index: 4, kind: input, shape index: {}]
  %s5 = inlined_call_operand.vmem [shape: bf16[784,400], index: 5, kind: input, shape index: {}]
  %s6 = inlined_call_operand.vmem [shape: f32[1,400], index: 6, kind: input, shape index: {}]
  %s7 = inlined_call_operand.vmem [shape: bf16[400,600], index: 7, kind: input, shape index: {}]
  %s8 = inlined_call_operand.vmem [shape: f32[1,600], index: 8, kind: input, shape index: {}]
  %s9 = inlined_call_operand.vmem [shape: bf16[600,128], index: 9, kind: input, shape index: {}]
  %s10 = inlined_call_operand.vmem [shape: f32[1,128], index: 10, kind: input, shape index: {}]
  %s11 = inlined_call_operand.hbm [shape: f32[8,128], index: 11, kind: output, shape index: {}]
  %s12 = sld [smem:[#allocation0]]
  $region58: #{tpu_custom_call.1} parent=0
    _
  %s14 = ssub.s32 1, %s12
  %s15 = scalar_select 0, %s14, %s12
  $region1: #{tpu_custom_call.1} parent=0
    #allocation2 [shape = 'u8[512]{0}', space=smem, size = 0x200, scoped, tag = 'input window, operand 0, single buffered']
    #allocation3 [shape = 's32[1]{0}', space=sflag, size = 0x4, scoped, tag = 'scoped memory for tpu_custom_call.1']
    #allocation4 [shape = 's32[1]{0}', space=sflag, size = 0x4, scoped, tag = 'scoped memory for tpu_custom_call.1']
    #allocation5 [shape = 'u8[4096]{0}', space=vmem, size = 0x1000, scoped, tag = 'output window, operand 0, single buffered']
    %16 = vsyncpa [#allocation4], 0
    %17 = vsyncpa [#allocation3], 0
    // Predicated region
    $region2: #{tpu_custom_call.1} parent=1 // pred_check
      _
    $region3: #{tpu_custom_call.1} parent=1 // pred_check_branch
      %19 = sbr.rel (0) target = $region5
    $region4: #{tpu_custom_call.1} parent=1 // pred_region
      %s21 = ssub.s32 16, 16
      %22 = vsyncadd [#allocation4], %s21
      %s24 = sshll.u32 %s0, 4
      %s25 = int_to_ptr.vmem [resolvable:$true] %s24
      %27 = dma.vmem_to_smem %s25, 16, [#allocation2], [#allocation4]
    $region5: #{tpu_custom_call.1} parent=1 // pred_fallthru
      _
    // Predicated region
    $region6: #{tpu_custom_call.1} parent=1 // pred_check
      _
    $region7: #{tpu_custom_call.1} parent=1 // pred_check_branch
      %29 = sbr.rel (0) target = $region9
    $region8: #{tpu_custom_call.1} parent=1 // pred_region
      _
    $region9: #{tpu_custom_call.1} parent=1 // pred_fallthru
      _
    // Predicated region
    $region10: #{tpu_custom_call.1} parent=1 // pred_check
      _
    $region11: #{tpu_custom_call.1} parent=1 // pred_check_branch
      %31 = sbr.rel (0) target = $region13
    $region12: #{tpu_custom_call.1} parent=1 // pred_region
      _
    $region13: #{tpu_custom_call.1} parent=1 // pred_fallthru
      _
    // Predicated region
    $region14: #{tpu_custom_call.1} parent=1 // pred_check
      _
    $region15: #{tpu_custom_call.1} parent=1 // pred_check_branch
      %33 = sbr.rel (0) target = $region17
    $region16: #{tpu_custom_call.1} parent=1 // pred_region
      _
    $region17: #{tpu_custom_call.1} parent=1 // pred_fallthru
      _
    // Predicated region
    $region18: #{tpu_custom_call.1} parent=1 // pred_check
      _
    $region19: #{tpu_custom_call.1} parent=1 // pred_check_branch
      %35 = sbr.rel (0) target = $region21
    $region20: #{tpu_custom_call.1} parent=1 // pred_region
      _
    $region21: #{tpu_custom_call.1} parent=1 // pred_fallthru
      _
    // Predicated region
    $region22: #{tpu_custom_call.1} parent=1 // pred_check
      _
    $region23: #{tpu_custom_call.1} parent=1 // pred_check_branch
      %37 = sbr.rel (0) target = $region25
    $region24: #{tpu_custom_call.1} parent=1 // pred_region
      _
    $region25: #{tpu_custom_call.1} parent=1 // pred_fallthru
      _
    // Predicated region
    $region26: #{tpu_custom_call.1} parent=1 // pred_check
      _
    $region27: #{tpu_custom_call.1} parent=1 // pred_check_branch
      %39 = sbr.rel (0) target = $region29
    $region28: #{tpu_custom_call.1} parent=1 // pred_region
      _
    $region29: #{tpu_custom_call.1} parent=1 // pred_fallthru
      _
    // Predicated region
    $region30: #{tpu_custom_call.1} parent=1 // pred_check
      _
    $region31: #{tpu_custom_call.1} parent=1 // pred_check_branch
      %41 = sbr.rel (0) target = $region33
    $region32: #{tpu_custom_call.1} parent=1 // pred_region
      _
    $region33: #{tpu_custom_call.1} parent=1 // pred_fallthru
      _
    // Predicated region
    $region34: #{tpu_custom_call.1} parent=1 // pred_check
      _
    $region35: #{tpu_custom_call.1} parent=1 // pred_check_branch
      %43 = sbr.rel (0) target = $region37
    $region36: #{tpu_custom_call.1} parent=1 // pred_region
      _
    $region37: #{tpu_custom_call.1} parent=1 // pred_fallthru
      _
    // Predicated region
    $region38: #{tpu_custom_call.1} parent=1 // pred_check
      _
    $region39: #{tpu_custom_call.1} parent=1 // pred_check_branch
      %45 = sbr.rel (0) target = $region41
    $region40: #{tpu_custom_call.1} parent=1 // pred_region
      _
    $region41: #{tpu_custom_call.1} parent=1 // pred_fallthru
      _
    // Predicated region
    $region42: #{tpu_custom_call.1} parent=1 // pred_check
      _
    $region43: #{tpu_custom_call.1} parent=1 // pred_check_branch
      %47 = sbr.rel (0) target = $region45
    $region44: #{tpu_custom_call.1} parent=1 // pred_region
      _
    $region45: #{tpu_custom_call.1} parent=1 // pred_fallthru
      _
    // Predicated region
    $region46: #{tpu_custom_call.1} parent=1 // pred_check
      _
    $region47: #{tpu_custom_call.1} parent=1 // pred_check_branch
      %49 = sbr.rel (0) target = $region49
    $region48: #{tpu_custom_call.1} parent=1 // pred_region
      %50 = dma.done [#allocation4], 16
    $region49: #{tpu_custom_call.1} parent=1 // pred_fallthru
      _
    %51 = sfence
    %s53 = sld [smem:[#allocation2]]
    %s54 = sld [smem:[#allocation2 + $0x1]]
    %s55 = sld [smem:[#allocation2 + $0x2]]
    %s56 = sld [smem:[#allocation2 + $0x3]]
    %s57 = sld [smem:[#allocation2 + $0x4]]
    %s58 = sld [smem:[#allocation2 + $0x5]]
    %v59 = vld [vmem:[%s1] sm:$0xff]
    %v60 = vld [vmem:[%s1 + $0x8] sm:$0xff]
    %v61 = vld [vmem:[%s1 + $0x10] sm:$0xff]
    %v62 = vld [vmem:[%s1 + $0x18] sm:$0xf]
    %v63 = vld [vmem:[%s2] sm:$0xff]
    %v64 = vld [vmem:[%s2 + $0x8] sm:$0xff]
    %v65 = vld [vmem:[%s2 + $0x10] sm:$0xff]
    %v66 = vld [vmem:[%s2 + $0x18] sm:$0xff]
    %v67 = vld [vmem:[%s5] sm:$0xff]
    %v68 = vld [vmem:[%s5 + $0x8] sm:$0xff]
    %v69 = vld [vmem:[%s5 + $0x10] sm:$0xff]
    %v70 = vld [vmem:[%s5 + $0x18] sm:$0xff]
    %v71 = vld [vmem:[%s5 + $0x20] sm:$0xff]
    %v72 = vld [vmem:[%s5 + $0x28] sm:$0xff]
    %v73 = vld [vmem:[%s5 + $0x30] sm:$0xff]
    %v74 = vld [vmem:[%s5 + $0x38] sm:$0xff]
    %v75 = vld [vmem:[%s5 + $0x40] sm:$0xff]
    %v76 = vld [vmem:[%s5 + $0x48] sm:$0xff]
    %v77 = vld [vmem:[%s5 + $0x50] sm:$0xff]
    %v78 = vld [vmem:[%s5 + $0x58] sm:$0xff]
    %v79 = vld [vmem:[%s5 + $0x60] sm:$0xff]
    %v80 = vld [vmem:[%s5 + $0x68] sm:$0xff]
    %v81 = vld [vmem:[%s5 + $0x70] sm:$0xff]
    %v82 = vld [vmem:[%s5 + $0x78] sm:$0xff]
    %v83 = vld [vmem:[%s5 + $0x80] sm:$0xff]
    %v84 = vld [vmem:[%s5 + $0x88] sm:$0xff]
    %v85 = vld [vmem:[%s5 + $0x90] sm:$0xff]
    %v86 = vld [vmem:[%s5 + $0x98] sm:$0xff]
    %v87 = vld [vmem:[%s5 + $0xa0] sm:$0xff]
    %v88 = vld [vmem:[%s5 + $0xa8] sm:$0xff]
    %v89 = vld [vmem:[%s5 + $0xb0] sm:$0xff]
    %v90 = vld [vmem:[%s5 + $0xb8] sm:$0xff]
    %v91 = vld [vmem:[%s5 + $0xc0] sm:$0xff]
    %v92 = vld [vmem:[%s5 + $0xc8] sm:$0xff]
    %v93 = vld [vmem:[%s5 + $0xd0] sm:$0xff]
    %v94 = vld [vmem:[%s5 + $0xd8] sm:$0xff]
    %v95 = vld [vmem:[%s5 + $0xe0] sm:$0xff]
    %v96 = vld [vmem:[%s5 + $0xe8] sm:$0xff]
    %v97 = vld [vmem:[%s5 + $0xf0] sm:$0xff]
    %v98 = vld [vmem:[%s5 + $0xf8] sm:$0xff]
    %v99 = vld [vmem:[%s5 + $0x100] sm:$0xff]
    %v100 = vld [vmem:[%s5 + $0x108] sm:$0xff]
    %v101 = vld [vmem:[%s5 + $0x110] sm:$0xff]
    %v102 = vld [vmem:[%s5 + $0x118] sm:$0xff]
    %v103 = vld [vmem:[%s5 + $0x120] sm:$0xff]
    %v104 = vld [vmem:[%s5 + $0x128] sm:$0xff]
    %v105 = vld [vmem:[%s5 + $0x130] sm:$0xff]
    %v106 = vld [vmem:[%s5 + $0x138] sm:$0xff]
    %v107 = vld [vmem:[%s5 + $0x140] sm:$0xff]
    %v108 = vld [vmem:[%s5 + $0x148] sm:$0xff]
    %v109 = vld [vmem:[%s5 + $0x150] sm:$0xff]
    %v110 = vld [vmem:[%s5 + $0x158] sm:$0xff]
    %v111 = vld [vmem:[%s5 + $0x160] sm:$0xff]
    %v112 = vld [vmem:[%s5 + $0x168] sm:$0xff]
    %v113 = vld [vmem:[%s5 + $0x170] sm:$0xff]
    %v114 = vld [vmem:[%s5 + $0x178] sm:$0xff]
    %v115 = vld [vmem:[%s5 + $0x180] sm:$0xff]
    %v116 = vld [vmem:[%s5 + $0x188] sm:$0xff]
    %v117 = vld [vmem:[%s5 + $0x190] sm:$0xff]
    %v118 = vld [vmem:[%s5 + $0x198] sm:$0xff]
    %v119 = vld [vmem:[%s5 + $0x1a0] sm:$0xff]
    %v120 = vld [vmem:[%s5 + $0x1a8] sm:$0xff]
    %v121 = vld [vmem:[%s5 + $0x1b0] sm:$0xff]
    %v122 = vld [vmem:[%s5 + $0x1b8] sm:$0xff]
    %v123 = vld [vmem:[%s5 + $0x1c0] sm:$0xff]
    %v124 = vld [vmem:[%s5 + $0x1c8] sm:$0xff]
    %v125 = vld [vmem:[%s5 + $0x1d0] sm:$0xff]
    %v126 = vld [vmem:[%s5 + $0x1d8] sm:$0xff]
    %v127 = vld [vmem:[%s5 + $0x1e0] sm:$0xff]
    %v128 = vld [vmem:[%s5 + $0x1e8] sm:$0xff]
    %v129 = vld [vmem:[%s5 + $0x1f0] sm:$0xff]
    %v130 = vld [vmem:[%s5 + $0x1f8] sm:$0xff]
    %v131 = vld [vmem:[%s5 + $0x200] sm:$0xff]
    %v132 = vld [vmem:[%s5 + $0x208] sm:$0xff]
    %v133 = vld [vmem:[%s5 + $0x210] sm:$0xff]
    %v134 = vld [vmem:[%s5 + $0x218] sm:$0xff]
    %v135 = vld [vmem:[%s5 + $0x220] sm:$0xff]
    %v136 = vld [vmem:[%s5 + $0x228] sm:$0xff]
    %v137 = vld [vmem:[%s5 + $0x230] sm:$0xff]
    %v138 = vld [vmem:[%s5 + $0x238] sm:$0xff]
    %v139 = vld [vmem:[%s5 + $0x240] sm:$0xff]
    %v140 = vld [vmem:[%s5 + $0x248] sm:$0xff]
    %v141 = vld [vmem:[%s5 + $0x250] sm:$0xff]
    %v142 = vld [vmem:[%s5 + $0x258] sm:$0xff]
    %v143 = vld [vmem:[%s5 + $0x260] sm:$0xff]
    %v144 = vld [vmem:[%s5 + $0x268] sm:$0xff]
    %v145 = vld [vmem:[%s5 + $0x270] sm:$0xff]
    %v146 = vld [vmem:[%s5 + $0x278] sm:$0xff]
    %v147 = vld [vmem:[%s5 + $0x280] sm:$0xff]
    %v148 = vld [vmem:[%s5 + $0x288] sm:$0xff]
    %v149 = vld [vmem:[%s5 + $0x290] sm:$0xff]
    %v150 = vld [vmem:[%s5 + $0x298] sm:$0xff]
    %v151 = vld [vmem:[%s5 + $0x2a0] sm:$0xff]
    %v152 = vld [vmem:[%s5 + $0x2a8] sm:$0xff]
    %v153 = vld [vmem:[%s5 + $0x2b0] sm:$0xff]
    %v154 = vld [vmem:[%s5 + $0x2b8] sm:$0xff]
    %v155 = vld [vmem:[%s5 + $0x2c0] sm:$0xff]
    %v156 = vld [vmem:[%s5 + $0x2c8] sm:$0xff]
    %v157 = vld [vmem:[%s5 + $0x2d0] sm:$0xff]
    %v158 = vld [vmem:[%s5 + $0x2d8] sm:$0xff]
    %v159 = vld [vmem:[%s5 + $0x2e0] sm:$0xff]
    %v160 = vld [vmem:[%s5 + $0x2e8] sm:$0xff]
    %v161 = vld [vmem:[%s5 + $0x2f0] sm:$0xff]
    %v162 = vld [vmem:[%s5 + $0x2f8] sm:$0xff]
    %v163 = vld [vmem:[%s5 + $0x300] sm:$0xff]
    %v164 = vld [vmem:[%s5 + $0x308] sm:$0xff]
    %v165 = vld [vmem:[%s5 + $0x310] sm:$0xff]
    %v166 = vld [vmem:[%s5 + $0x318] sm:$0xff]
    %v167 = vld [vmem:[%s5 + $0x320] sm:$0xff]
    %v168 = vld [vmem:[%s5 + $0x328] sm:$0xff]
    %v169 = vld [vmem:[%s5 + $0x330] sm:$0xff]
    %v170 = vld [vmem:[%s5 + $0x338] sm:$0xff]
    %v171 = vld [vmem:[%s5 + $0x340] sm:$0xff]
    %v172 = vld [vmem:[%s5 + $0x348] sm:$0xff]
    %v173 = vld [vmem:[%s5 + $0x350] sm:$0xff]
    %v174 = vld [vmem:[%s5 + $0x358] sm:$0xff]
    %v175 = vld [vmem:[%s5 + $0x360] sm:$0xff]
    %v176 = vld [vmem:[%s5 + $0x368] sm:$0xff]
    %v177 = vld [vmem:[%s5 + $0x370] sm:$0xff]
    %v178 = vld [vmem:[%s5 + $0x378] sm:$0xff]
    %v179 = vld [vmem:[%s5 + $0x380] sm:$0xff]
    %v180 = vld [vmem:[%s5 + $0x388] sm:$0xff]
    %v181 = vld [vmem:[%s5 + $0x390] sm:$0xff]
    %v182 = vld [vmem:[%s5 + $0x398] sm:$0xff]
    %v183 = vld [vmem:[%s5 + $0x3a0] sm:$0xff]
    %v184 = vld [vmem:[%s5 + $0x3a8] sm:$0xff]
    %v185 = vld [vmem:[%s5 + $0x3b0] sm:$0xff]
    %v186 = vld [vmem:[%s5 + $0x3b8] sm:$0xff]
    %v187 = vld [vmem:[%s5 + $0x3c0] sm:$0xff]
    %v188 = vld [vmem:[%s5 + $0x3c8] sm:$0xff]
    %v189 = vld [vmem:[%s5 + $0x3d0] sm:$0xff]
    %v190 = vld [vmem:[%s5 + $0x3d8] sm:$0xff]
    %v191 = vld [vmem:[%s5 + $0x3e0] sm:$0xff]
    %v192 = vld [vmem:[%s5 + $0x3e8] sm:$0xff]
    %v193 = vld [vmem:[%s5 + $0x3f0] sm:$0xff]
    %v194 = vld [vmem:[%s5 + $0x3f8] sm:$0xff]
    %v195 = vld [vmem:[%s5 + $0x400] sm:$0xff]
    %v196 = vld [vmem:[%s5 + $0x408] sm:$0xff]
    %v197 = vld [vmem:[%s5 + $0x410] sm:$0xff]
    %v198 = vld [vmem:[%s5 + $0x418] sm:$0xff]
    %v199 = vld [vmem:[%s5 + $0x420] sm:$0xff]
    %v200 = vld [vmem:[%s5 + $0x428] sm:$0xff]
    %v201 = vld [vmem:[%s5 + $0x430] sm:$0xff]
    %v202 = vld [vmem:[%s5 + $0x438] sm:$0xff]
    %v203 = vld [vmem:[%s5 + $0x440] sm:$0xff]
    %v204 = vld [vmem:[%s5 + $0x448] sm:$0xff]
    %v205 = vld [vmem:[%s5 + $0x450] sm:$0xff]
    %v206 = vld [vmem:[%s5 + $0x458] sm:$0xff]
    %v207 = vld [vmem:[%s5 + $0x460] sm:$0xff]
    %v208 = vld [vmem:[%s5 + $0x468] sm:$0xff]
    %v209 = vld [vmem:[%s5 + $0x470] sm:$0xff]
    %v210 = vld [vmem:[%s5 + $0x478] sm:$0xff]
    %v211 = vld [vmem:[%s5 + $0x480] sm:$0xff]
    %v212 = vld [vmem:[%s5 + $0x488] sm:$0xff]
    %v213 = vld [vmem:[%s5 + $0x490] sm:$0xff]
    %v214 = vld [vmem:[%s5 + $0x498] sm:$0xff]
    %v215 = vld [vmem:[%s5 + $0x4a0] sm:$0xff]
    %v216 = vld [vmem:[%s5 + $0x4a8] sm:$0xff]
    %v217 = vld [vmem:[%s5 + $0x4b0] sm:$0xff]
    %v218 = vld [vmem:[%s5 + $0x4b8] sm:$0xff]
    %v219 = vld [vmem:[%s5 + $0x4c0] sm:$0xff]
    %v220 = vld [vmem:[%s5 + $0x4c8] sm:$0xff]
    %v221 = vld [vmem:[%s5 + $0x4d0] sm:$0xff]
    %v222 = vld [vmem:[%s5 + $0x4d8] sm:$0xff]
    %v223 = vld [vmem:[%s5 + $0x4e0] sm:$0xff]
    %v224 = vld [vmem:[%s5 + $0x4e8] sm:$0xff]
    %v225 = vld [vmem:[%s5 + $0x4f0] sm:$0xff]
    %v226 = vld [vmem:[%s5 + $0x4f8] sm:$0xff]
    %v227 = vld [vmem:[%s5 + $0x500] sm:$0xff]
    %v228 = vld [vmem:[%s5 + $0x508] sm:$0xff]
    %v229 = vld [vmem:[%s5 + $0x510] sm:$0xff]
    %v230 = vld [vmem:[%s5 + $0x518] sm:$0xff]
    %v231 = vld [vmem:[%s5 + $0x520] sm:$0xff]
    %v232 = vld [vmem:[%s5 + $0x528] sm:$0xff]
    %v233 = vld [vmem:[%s5 + $0x530] sm:$0xff]
    %v234 = vld [vmem:[%s5 + $0x538] sm:$0xff]
    %v235 = vld [vmem:[%s5 + $0x540] sm:$0xff]
    %v236 = vld [vmem:[%s5 + $0x548] sm:$0xff]
    %v237 = vld [vmem:[%s5 + $0x550] sm:$0xff]
    %v238 = vld [vmem:[%s5 + $0x558] sm:$0xff]
    %v239 = vld [vmem:[%s5 + $0x560] sm:$0xff]
    %v240 = vld [vmem:[%s5 + $0x568] sm:$0xff]
    %v241 = vld [vmem:[%s5 + $0x570] sm:$0xff]
    %v242 = vld [vmem:[%s5 + $0x578] sm:$0xff]
    %v243 = vld [vmem:[%s5 + $0x580] sm:$0xff]
    %v244 = vld [vmem:[%s5 + $0x588] sm:$0xff]
    %v245 = vld [vmem:[%s5 + $0x590] sm:$0xff]
    %v246 = vld [vmem:[%s5 + $0x598] sm:$0xff]
    %v247 = vld [vmem:[%s5 + $0x5a0] sm:$0xff]
    %v248 = vld [vmem:[%s5 + $0x5a8] sm:$0xff]
    %v249 = vld [vmem:[%s5 + $0x5b0] sm:$0xff]
    %v250 = vld [vmem:[%s5 + $0x5b8] sm:$0xff]
    %v251 = vld [vmem:[%s5 + $0x5c0] sm:$0xff]
    %v252 = vld [vmem:[%s5 + $0x5c8] sm:$0xff]
    %v253 = vld [vmem:[%s5 + $0x5d0] sm:$0xff]
    %v254 = vld [vmem:[%s5 + $0x5d8] sm:$0xff]
    %v255 = vld [vmem:[%s5 + $0x5e0] sm:$0xff]
    %v256 = vld [vmem:[%s5 + $0x5e8] sm:$0xff]
    %v257 = vld [vmem:[%s5 + $0x5f0] sm:$0xff]
    %v258 = vld [vmem:[%s5 + $0x5f8] sm:$0xff]
    %v259 = vld [vmem:[%s5 + $0x600] sm:$0xff]
    %v260 = vld [vmem:[%s5 + $0x608] sm:$0xff]
    %v261 = vld [vmem:[%s5 + $0x610] sm:$0xff]
    %v262 = vld [vmem:[%s5 + $0x618] sm:$0xff]
    %v263 = vld [vmem:[%s6] sm:$0xf]
    %v265 = vlaneseq
    %v266 = vshrl.u32 %v265, 7
    %v267 = vsub.s32 0, %v266
    %v268 = vrot.slane %v263, %v267
    %v269 = vlaneseq
    %v270 = vshrl.u32 %v269, 7
    %v271 = vsub.s32 1, %v270
    %v272 = vrot.slane %v263, %v271
    %v273 = vlaneseq
    %v274 = vshrl.u32 %v273, 7
    %v275 = vsub.s32 2, %v274
    %v276 = vrot.slane %v263, %v275
    %v277 = vlaneseq
    %v278 = vshrl.u32 %v277, 7
    %v279 = vsub.s32 3, %v278
    %v280 = vrot.slane %v263, %v279
    %v289 = vunpack.c.l.b16 %v59
    %v290 = vunpack.c.h.b16 %v59
    %v291 = vunpack.c.l.b16 %v60
    %v292 = vunpack.c.h.b16 %v60
    %v293 = vunpack.c.l.b16 %v61
    %v294 = vunpack.c.h.b16 %v61
    %v295 = vunpack.c.l.b16 %v62
    %v296 = vpack.c.b16 %v289, %v289
    %v297 = vpack.c.b16 %v290, %v290
    %v298 = vpack.c.b16 %v291, %v291
    %v299 = vpack.c.b16 %v292, %v292
    %v300 = vpack.c.b16 %v293, %v293
    %v301 = vpack.c.b16 %v294, %v294
    %v302 = vpack.c.b16 %v295, %v295
    %v505 = vunpack.c.l.b16 %v67
    %v506 = vunpack.c.h.b16 %v67
    %v507 = vunpack.c.l.b16 %v68
    %v508 = vunpack.c.h.b16 %v68
    %v509 = vunpack.c.l.b16 %v69
    %v510 = vunpack.c.h.b16 %v69
    %v511 = vunpack.c.l.b16 %v70
    %v512 = vunpack.c.h.b16 %v70
    %v513 = vunpack.c.l.b16 %v71
    %v514 = vunpack.c.h.b16 %v71
    %v515 = vunpack.c.l.b16 %v72
    %v516 = vunpack.c.h.b16 %v72
    %v517 = vunpack.c.l.b16 %v73
    %v518 = vunpack.c.h.b16 %v73
    %v519 = vunpack.c.l.b16 %v74
    %v520 = vunpack.c.h.b16 %v74
    %v521 = vunpack.c.l.b16 %v75
    %v522 = vunpack.c.h.b16 %v75
    %v523 = vunpack.c.l.b16 %v76
    %v524 = vunpack.c.h.b16 %v76
    %v525 = vunpack.c.l.b16 %v77
    %v526 = vunpack.c.h.b16 %v77
    %v527 = vunpack.c.l.b16 %v78
    %v528 = vunpack.c.h.b16 %v78
    %v529 = vunpack.c.l.b16 %v79
    %v530 = vunpack.c.h.b16 %v79
    %v531 = vunpack.c.l.b16 %v80
    %v532 = vunpack.c.h.b16 %v80
    %v533 = vunpack.c.l.b16 %v81
    %v534 = vunpack.c.h.b16 %v81
    %v535 = vunpack.c.l.b16 %v82
    %v536 = vunpack.c.h.b16 %v82
    %v537 = vunpack.c.l.b16 %v83
    %v538 = vunpack.c.h.b16 %v83
    %v539 = vunpack.c.l.b16 %v84
    %v540 = vunpack.c.h.b16 %v84
    %v541 = vunpack.c.l.b16 %v85
    %v542 = vunpack.c.h.b16 %v85
    %v543 = vunpack.c.l.b16 %v86
    %v544 = vunpack.c.h.b16 %v86
    %v545 = vunpack.c.l.b16 %v87
    %v546 = vunpack.c.h.b16 %v87
    %v547 = vunpack.c.l.b16 %v88
    %v548 = vunpack.c.h.b16 %v88
    %v549 = vunpack.c.l.b16 %v89
    %v550 = vunpack.c.h.b16 %v89
    %v551 = vunpack.c.l.b16 %v90
    %v552 = vunpack.c.h.b16 %v90
    %v553 = vunpack.c.l.b16 %v91
    %v554 = vunpack.c.h.b16 %v91
    %v555 = vunpack.c.l.b16 %v92
    %v556 = vunpack.c.h.b16 %v92
    %v557 = vunpack.c.l.b16 %v93
    %v558 = vunpack.c.h.b16 %v93
    %v559 = vunpack.c.l.b16 %v94
    %v560 = vunpack.c.h.b16 %v94
    %v561 = vunpack.c.l.b16 %v95
    %v562 = vunpack.c.h.b16 %v95
    %v563 = vunpack.c.l.b16 %v96
    %v564 = vunpack.c.h.b16 %v96
    %v565 = vunpack.c.l.b16 %v97
    %v566 = vunpack.c.h.b16 %v97
    %v567 = vunpack.c.l.b16 %v98
    %v568 = vunpack.c.h.b16 %v98
    %v569 = vunpack.c.l.b16 %v99
    %v570 = vunpack.c.h.b16 %v99
    %v571 = vunpack.c.l.b16 %v100
    %v572 = vunpack.c.h.b16 %v100
    %v573 = vunpack.c.l.b16 %v101
    %v574 = vunpack.c.h.b16 %v101
    %v575 = vunpack.c.l.b16 %v102
    %v576 = vunpack.c.h.b16 %v102
    %v577 = vunpack.c.l.b16 %v103
    %v578 = vunpack.c.h.b16 %v103
    %v579 = vunpack.c.l.b16 %v104
    %v580 = vunpack.c.h.b16 %v104
    %v581 = vunpack.c.l.b16 %v105
    %v582 = vunpack.c.h.b16 %v105
    %v583 = vunpack.c.l.b16 %v106
    %v584 = vunpack.c.h.b16 %v106
    %v585 = vunpack.c.l.b16 %v107
    %v586 = vunpack.c.h.b16 %v107
    %v587 = vunpack.c.l.b16 %v108
    %v588 = vunpack.c.h.b16 %v108
    %v589 = vunpack.c.l.b16 %v109
    %v590 = vunpack.c.h.b16 %v109
    %v591 = vunpack.c.l.b16 %v110
    %v592 = vunpack.c.h.b16 %v110
    %v593 = vunpack.c.l.b16 %v111
    %v594 = vunpack.c.h.b16 %v111
    %v595 = vunpack.c.l.b16 %v112
    %v596 = vunpack.c.h.b16 %v112
    %v597 = vunpack.c.l.b16 %v113
    %v598 = vunpack.c.h.b16 %v113
    %v599 = vunpack.c.l.b16 %v114
    %v600 = vunpack.c.h.b16 %v114
    %v601 = vunpack.c.l.b16 %v115
    %v602 = vunpack.c.h.b16 %v115
    %v603 = vunpack.c.l.b16 %v116
    %v604 = vunpack.c.h.b16 %v116
    %v605 = vunpack.c.l.b16 %v117
    %v606 = vunpack.c.h.b16 %v117
    %v607 = vunpack.c.l.b16 %v118
    %v608 = vunpack.c.h.b16 %v118
    %v609 = vunpack.c.l.b16 %v119
    %v610 = vunpack.c.h.b16 %v119
    %v611 = vunpack.c.l.b16 %v120
    %v612 = vunpack.c.h.b16 %v120
    %v613 = vunpack.c.l.b16 %v121
    %v614 = vunpack.c.h.b16 %v121
    %v615 = vunpack.c.l.b16 %v122
    %v616 = vunpack.c.h.b16 %v122
    %v617 = vunpack.c.l.b16 %v123
    %v618 = vunpack.c.h.b16 %v123
    %v619 = vunpack.c.l.b16 %v124
    %v620 = vunpack.c.h.b16 %v124
    %v621 = vunpack.c.l.b16 %v125
    %v622 = vunpack.c.h.b16 %v125
    %v623 = vunpack.c.l.b16 %v126
    %v624 = vunpack.c.h.b16 %v126
    %v625 = vunpack.c.l.b16 %v127
    %v626 = vunpack.c.h.b16 %v127
    %v627 = vunpack.c.l.b16 %v128
    %v628 = vunpack.c.h.b16 %v128
    %v629 = vunpack.c.l.b16 %v129
    %v630 = vunpack.c.h.b16 %v129
    %v631 = vunpack.c.l.b16 %v130
    %v632 = vunpack.c.h.b16 %v130
    %v633 = vunpack.c.l.b16 %v131
    %v634 = vunpack.c.h.b16 %v131
    %v635 = vunpack.c.l.b16 %v132
    %v636 = vunpack.c.h.b16 %v132
    %v637 = vunpack.c.l.b16 %v133
    %v638 = vunpack.c.h.b16 %v133
    %v639 = vunpack.c.l.b16 %v134
    %v640 = vunpack.c.h.b16 %v134
    %v641 = vunpack.c.l.b16 %v135
    %v642 = vunpack.c.h.b16 %v135
    %v643 = vunpack.c.l.b16 %v136
    %v644 = vunpack.c.h.b16 %v136
    %v645 = vunpack.c.l.b16 %v137
    %v646 = vunpack.c.h.b16 %v137
    %v647 = vunpack.c.l.b16 %v138
    %v648 = vunpack.c.h.b16 %v138
    %v649 = vunpack.c.l.b16 %v139
    %v650 = vunpack.c.h.b16 %v139
    %v651 = vunpack.c.l.b16 %v140
    %v652 = vunpack.c.h.b16 %v140
    %v653 = vunpack.c.l.b16 %v141
    %v654 = vunpack.c.h.b16 %v141
    %v655 = vunpack.c.l.b16 %v142
    %v656 = vunpack.c.h.b16 %v142
    %v657 = vunpack.c.l.b16 %v143
    %v658 = vunpack.c.h.b16 %v143
    %v659 = vunpack.c.l.b16 %v144
    %v660 = vunpack.c.h.b16 %v144
    %v661 = vunpack.c.l.b16 %v145
    %v662 = vunpack.c.h.b16 %v145
    %v663 = vunpack.c.l.b16 %v146
    %v664 = vunpack.c.h.b16 %v146
    %v665 = vunpack.c.l.b16 %v147
    %v666 = vunpack.c.h.b16 %v147
    %v667 = vunpack.c.l.b16 %v148
    %v668 = vunpack.c.h.b16 %v148
    %v669 = vunpack.c.l.b16 %v149
    %v670 = vunpack.c.h.b16 %v149
    %v671 = vunpack.c.l.b16 %v150
    %v672 = vunpack.c.h.b16 %v150
    %v673 = vunpack.c.l.b16 %v151
    %v674 = vunpack.c.h.b16 %v151
    %v675 = vunpack.c.l.b16 %v152
    %v676 = vunpack.c.h.b16 %v152
    %v677 = vunpack.c.l.b16 %v153
    %v678 = vunpack.c.h.b16 %v153
    %v679 = vunpack.c.l.b16 %v154
    %v680 = vunpack.c.h.b16 %v154
    %v681 = vunpack.c.l.b16 %v155
    %v682 = vunpack.c.h.b16 %v155
    %v683 = vunpack.c.l.b16 %v156
    %v684 = vunpack.c.h.b16 %v156
    %v685 = vunpack.c.l.b16 %v157
    %v686 = vunpack.c.h.b16 %v157
    %v687 = vunpack.c.l.b16 %v158
    %v688 = vunpack.c.h.b16 %v158
    %v689 = vunpack.c.l.b16 %v159
    %v690 = vunpack.c.h.b16 %v159
    %v691 = vunpack.c.l.b16 %v160
    %v692 = vunpack.c.h.b16 %v160
    %v693 = vunpack.c.l.b16 %v161
    %v694 = vunpack.c.h.b16 %v161
    %v695 = vunpack.c.l.b16 %v162
    %v696 = vunpack.c.h.b16 %v162
    %v697 = vunpack.c.l.b16 %v163
    %v698 = vunpack.c.h.b16 %v163
    %v699 = vunpack.c.l.b16 %v164
    %v700 = vunpack.c.h.b16 %v164
    %v701 = vunpack.c.l.b16 %v165
    %v702 = vunpack.c.h.b16 %v165
    %v703 = vunpack.c.l.b16 %v166
    %v704 = vunpack.c.h.b16 %v166
    %v705 = vunpack.c.l.b16 %v167
    %v706 = vunpack.c.h.b16 %v167
    %v707 = vunpack.c.l.b16 %v168
    %v708 = vunpack.c.h.b16 %v168
    %v709 = vunpack.c.l.b16 %v169
    %v710 = vunpack.c.h.b16 %v169
    %v711 = vunpack.c.l.b16 %v170
    %v712 = vunpack.c.h.b16 %v170
    %v713 = vunpack.c.l.b16 %v171
    %v714 = vunpack.c.h.b16 %v171
    %v715 = vunpack.c.l.b16 %v172
    %v716 = vunpack.c.h.b16 %v172
    %v717 = vunpack.c.l.b16 %v173
    %v718 = vunpack.c.h.b16 %v173
    %v719 = vunpack.c.l.b16 %v174
    %v720 = vunpack.c.h.b16 %v174
    %v721 = vunpack.c.l.b16 %v175
    %v722 = vunpack.c.h.b16 %v175
    %v723 = vunpack.c.l.b16 %v176
    %v724 = vunpack.c.h.b16 %v176
    %v725 = vunpack.c.l.b16 %v177
    %v726 = vunpack.c.h.b16 %v177
    %v727 = vunpack.c.l.b16 %v178
    %v728 = vunpack.c.h.b16 %v178
    %v729 = vunpack.c.l.b16 %v179
    %v730 = vunpack.c.h.b16 %v179
    %v731 = vunpack.c.l.b16 %v180
    %v732 = vunpack.c.h.b16 %v180
    %v733 = vunpack.c.l.b16 %v181
    %v734 = vunpack.c.h.b16 %v181
    %v735 = vunpack.c.l.b16 %v182
    %v736 = vunpack.c.h.b16 %v182
    %v737 = vunpack.c.l.b16 %v183
    %v738 = vunpack.c.h.b16 %v183
    %v739 = vunpack.c.l.b16 %v184
    %v740 = vunpack.c.h.b16 %v184
    %v741 = vunpack.c.l.b16 %v185
    %v742 = vunpack.c.h.b16 %v185
    %v743 = vunpack.c.l.b16 %v186
    %v744 = vunpack.c.h.b16 %v186
    %v745 = vunpack.c.l.b16 %v187
    %v746 = vunpack.c.h.b16 %v187
    %v747 = vunpack.c.l.b16 %v188
    %v748 = vunpack.c.h.b16 %v188
    %v749 = vunpack.c.l.b16 %v189
    %v750 = vunpack.c.h.b16 %v189
    %v751 = vunpack.c.l.b16 %v190
    %v752 = vunpack.c.h.b16 %v190
    %v753 = vunpack.c.l.b16 %v191
    %v754 = vunpack.c.h.b16 %v191
    %v755 = vunpack.c.l.b16 %v192
    %v756 = vunpack.c.h.b16 %v192
    %v757 = vunpack.c.l.b16 %v193
    %v758 = vunpack.c.h.b16 %v193
    %v759 = vunpack.c.l.b16 %v194
    %v760 = vunpack.c.h.b16 %v194
    %v761 = vunpack.c.l.b16 %v195
    %v762 = vunpack.c.h.b16 %v195
    %v763 = vunpack.c.l.b16 %v196
    %v764 = vunpack.c.h.b16 %v196
    %v765 = vunpack.c.l.b16 %v197
    %v766 = vunpack.c.h.b16 %v197
    %v767 = vunpack.c.l.b16 %v198
    %v768 = vunpack.c.h.b16 %v198
    %v769 = vunpack.c.l.b16 %v199
    %v770 = vunpack.c.h.b16 %v199
    %v771 = vunpack.c.l.b16 %v200
    %v772 = vunpack.c.h.b16 %v200
    %v773 = vunpack.c.l.b16 %v201
    %v774 = vunpack.c.h.b16 %v201
    %v775 = vunpack.c.l.b16 %v202
    %v776 = vunpack.c.h.b16 %v202
    %v777 = vunpack.c.l.b16 %v203
    %v778 = vunpack.c.h.b16 %v203
    %v779 = vunpack.c.l.b16 %v204
    %v780 = vunpack.c.h.b16 %v204
    %v781 = vunpack.c.l.b16 %v205
    %v782 = vunpack.c.h.b16 %v205
    %v783 = vunpack.c.l.b16 %v206
    %v784 = vunpack.c.h.b16 %v206
    %v785 = vunpack.c.l.b16 %v207
    %v786 = vunpack.c.h.b16 %v207
    %v787 = vunpack.c.l.b16 %v208
    %v788 = vunpack.c.h.b16 %v208
    %v789 = vunpack.c.l.b16 %v209
    %v790 = vunpack.c.h.b16 %v209
    %v791 = vunpack.c.l.b16 %v210
    %v792 = vunpack.c.h.b16 %v210
    %v793 = vunpack.c.l.b16 %v211
    %v794 = vunpack.c.h.b16 %v211
    %v795 = vunpack.c.l.b16 %v212
    %v796 = vunpack.c.h.b16 %v212
    %v797 = vunpack.c.l.b16 %v213
    %v798 = vunpack.c.h.b16 %v213
    %v799 = vunpack.c.l.b16 %v214
    %v800 = vunpack.c.h.b16 %v214
    %v801 = vunpack.c.l.b16 %v215
    %v802 = vunpack.c.h.b16 %v215
    %v803 = vunpack.c.l.b16 %v216
    %v804 = vunpack.c.h.b16 %v216
    %v805 = vunpack.c.l.b16 %v217
    %v806 = vunpack.c.h.b16 %v217
    %v807 = vunpack.c.l.b16 %v218
    %v808 = vunpack.c.h.b16 %v218
    %v809 = vunpack.c.l.b16 %v219
    %v810 = vunpack.c.h.b16 %v219
    %v811 = vunpack.c.l.b16 %v220
    %v812 = vunpack.c.h.b16 %v220
    %v813 = vunpack.c.l.b16 %v221
    %v814 = vunpack.c.h.b16 %v221
    %v815 = vunpack.c.l.b16 %v222
    %v816 = vunpack.c.h.b16 %v222
    %v817 = vunpack.c.l.b16 %v223
    %v818 = vunpack.c.h.b16 %v223
    %v819 = vunpack.c.l.b16 %v224
    %v820 = vunpack.c.h.b16 %v224
    %v821 = vunpack.c.l.b16 %v225
    %v822 = vunpack.c.h.b16 %v225
    %v823 = vunpack.c.l.b16 %v226
    %v824 = vunpack.c.h.b16 %v226
    %v825 = vunpack.c.l.b16 %v227
    %v826 = vunpack.c.h.b16 %v227
    %v827 = vunpack.c.l.b16 %v228
    %v828 = vunpack.c.h.b16 %v228
    %v829 = vunpack.c.l.b16 %v229
    %v830 = vunpack.c.h.b16 %v229
    %v831 = vunpack.c.l.b16 %v230
    %v832 = vunpack.c.h.b16 %v230
    %v833 = vunpack.c.l.b16 %v231
    %v834 = vunpack.c.h.b16 %v231
    %v835 = vunpack.c.l.b16 %v232
    %v836 = vunpack.c.h.b16 %v232
    %v837 = vunpack.c.l.b16 %v233
    %v838 = vunpack.c.h.b16 %v233
    %v839 = vunpack.c.l.b16 %v234
    %v840 = vunpack.c.h.b16 %v234
    %v841 = vunpack.c.l.b16 %v235
    %v842 = vunpack.c.h.b16 %v235
    %v843 = vunpack.c.l.b16 %v236
    %v844 = vunpack.c.h.b16 %v236
    %v845 = vunpack.c.l.b16 %v237
    %v846 = vunpack.c.h.b16 %v237
    %v847 = vunpack.c.l.b16 %v238
    %v848 = vunpack.c.h.b16 %v238
    %v849 = vunpack.c.l.b16 %v239
    %v850 = vunpack.c.h.b16 %v239
    %v851 = vunpack.c.l.b16 %v240
    %v852 = vunpack.c.h.b16 %v240
    %v853 = vunpack.c.l.b16 %v241
    %v854 = vunpack.c.h.b16 %v241
    %v855 = vunpack.c.l.b16 %v242
    %v856 = vunpack.c.h.b16 %v242
    %v857 = vunpack.c.l.b16 %v243
    %v858 = vunpack.c.h.b16 %v243
    %v859 = vunpack.c.l.b16 %v244
    %v860 = vunpack.c.h.b16 %v244
    %v861 = vunpack.c.l.b16 %v245
    %v862 = vunpack.c.h.b16 %v245
    %v863 = vunpack.c.l.b16 %v246
    %v864 = vunpack.c.h.b16 %v246
    %v865 = vunpack.c.l.b16 %v247
    %v866 = vunpack.c.h.b16 %v247
    %v867 = vunpack.c.l.b16 %v248
    %v868 = vunpack.c.h.b16 %v248
    %v869 = vunpack.c.l.b16 %v249
    %v870 = vunpack.c.h.b16 %v249
    %v871 = vunpack.c.l.b16 %v250
    %v872 = vunpack.c.h.b16 %v250
    %v873 = vunpack.c.l.b16 %v251
    %v874 = vunpack.c.h.b16 %v251
    %v875 = vunpack.c.l.b16 %v252
    %v876 = vunpack.c.h.b16 %v252
    %v877 = vunpack.c.l.b16 %v253
    %v878 = vunpack.c.h.b16 %v253
    %v879 = vunpack.c.l.b16 %v254
    %v880 = vunpack.c.h.b16 %v254
    %v881 = vunpack.c.l.b16 %v255
    %v882 = vunpack.c.h.b16 %v255
    %v883 = vunpack.c.l.b16 %v256
    %v884 = vunpack.c.h.b16 %v256
    %v885 = vunpack.c.l.b16 %v257
    %v886 = vunpack.c.h.b16 %v257
    %v887 = vunpack.c.l.b16 %v258
    %v888 = vunpack.c.h.b16 %v258
    %v889 = vunpack.c.l.b16 %v259
    %v890 = vunpack.c.h.b16 %v259
    %v891 = vunpack.c.l.b16 %v260
    %v892 = vunpack.c.h.b16 %v260
    %v893 = vunpack.c.l.b16 %v261
    %v894 = vunpack.c.h.b16 %v261
    %v895 = vunpack.c.l.b16 %v262
    %v896 = vunpack.c.h.b16 %v262
    %v897 = vpack.c.b16 %v509, %v505
    %v898 = vpack.c.b16 %v510, %v506
    %v899 = vpack.c.b16 %v511, %v507
    %v900 = vpack.c.b16 %v512, %v508
    %v901 = vpack.c.b16 %v517, %v513
    %v902 = vpack.c.b16 %v518, %v514
    %v903 = vpack.c.b16 %v519, %v515
    %v904 = vpack.c.b16 %v520, %v516
    %v905 = vpack.c.b16 %v525, %v521
    %v906 = vpack.c.b16 %v526, %v522
    %v907 = vpack.c.b16 %v527, %v523
    %v908 = vpack.c.b16 %v528, %v524
    %v909 = vpack.c.b16 %v533, %v529
    %v910 = vpack.c.b16 %v534, %v530
    %v911 = vpack.c.b16 %v535, %v531
    %v912 = vpack.c.b16 %v536, %v532
    %v913 = vpack.c.b16 %v541, %v537
    %v914 = vpack.c.b16 %v542, %v538
    %v915 = vpack.c.b16 %v543, %v539
    %v916 = vpack.c.b16 %v544, %v540
    %v917 = vpack.c.b16 %v549, %v545
    %v918 = vpack.c.b16 %v550, %v546
    %v919 = vpack.c.b16 %v551, %v547
    %v920 = vpack.c.b16 %v552, %v548
    %v921 = vpack.c.b16 %v557, %v553
    %v922 = vpack.c.b16 %v558, %v554
    %v923 = vpack.c.b16 %v559, %v555
    %v924 = vpack.c.b16 %v560, %v556
    %v925 = vpack.c.b16 %v565, %v561
    %v926 = vpack.c.b16 %v566, %v562
    %v927 = vpack.c.b16 %v567, %v563
    %v928 = vpack.c.b16 %v568, %v564
    %v929 = vpack.c.b16 %v573, %v569
    %v930 = vpack.c.b16 %v574, %v570
    %v931 = vpack.c.b16 %v575, %v571
    %v932 = vpack.c.b16 %v576, %v572
    %v933 = vpack.c.b16 %v581, %v577
    %v934 = vpack.c.b16 %v582, %v578
    %v935 = vpack.c.b16 %v583, %v579
    %v936 = vpack.c.b16 %v584, %v580
    %v937 = vpack.c.b16 %v589, %v585
    %v938 = vpack.c.b16 %v590, %v586
    %v939 = vpack.c.b16 %v591, %v587
    %v940 = vpack.c.b16 %v592, %v588
    %v941 = vpack.c.b16 %v597, %v593
    %v942 = vpack.c.b16 %v598, %v594
    %v943 = vpack.c.b16 %v599, %v595
    %v944 = vpack.c.b16 %v600, %v596
    %v945 = vpack.c.b16 %v605, %v601
    %v946 = vpack.c.b16 %v606, %v602
    %v947 = vpack.c.b16 %v607, %v603
    %v948 = vpack.c.b16 %v608, %v604
    %v949 = vpack.c.b16 %v613, %v609
    %v950 = vpack.c.b16 %v614, %v610
    %v951 = vpack.c.b16 %v615, %v611
    %v952 = vpack.c.b16 %v616, %v612
    %v953 = vpack.c.b16 %v621, %v617
    %v954 = vpack.c.b16 %v622, %v618
    %v955 = vpack.c.b16 %v623, %v619
    %v956 = vpack.c.b16 %v624, %v620
    %v957 = vpack.c.b16 %v629, %v625
    %v958 = vpack.c.b16 %v630, %v626
    %v959 = vpack.c.b16 %v631, %v627
    %v960 = vpack.c.b16 %v632, %v628
    %v961 = vpack.c.b16 %v637, %v633
    %v962 = vpack.c.b16 %v638, %v634
    %v963 = vpack.c.b16 %v639, %v635
    %v964 = vpack.c.b16 %v640, %v636
    %v965 = vpack.c.b16 %v645, %v641
    %v966 = vpack.c.b16 %v646, %v642
    %v967 = vpack.c.b16 %v647, %v643
    %v968 = vpack.c.b16 %v648, %v644
    %v969 = vpack.c.b16 %v653, %v649
    %v970 = vpack.c.b16 %v654, %v650
    %v971 = vpack.c.b16 %v655, %v651
    %v972 = vpack.c.b16 %v656, %v652
    %v973 = vpack.c.b16 %v661, %v657
    %v974 = vpack.c.b16 %v662, %v658
    %v975 = vpack.c.b16 %v663, %v659
    %v976 = vpack.c.b16 %v664, %v660
    %v977 = vpack.c.b16 %v669, %v665
    %v978 = vpack.c.b16 %v670, %v666
    %v979 = vpack.c.b16 %v671, %v667
    %v980 = vpack.c.b16 %v672, %v668
    %v981 = vpack.c.b16 %v677, %v673
    %v982 = vpack.c.b16 %v678, %v674
    %v983 = vpack.c.b16 %v679, %v675
    %v984 = vpack.c.b16 %v680, %v676
    %v985 = vpack.c.b16 %v685, %v681
    %v986 = vpack.c.b16 %v686, %v682
    %v987 = vpack.c.b16 %v687, %v683
    %v988 = vpack.c.b16 %v688, %v684
    %v989 = vpack.c.b16 %v693, %v689
    %v990 = vpack.c.b16 %v694, %v690
    %v991 = vpack.c.b16 %v695, %v691
    %v992 = vpack.c.b16 %v696, %v692
    %v993 = vpack.c.b16 %v701, %v697
    %v994 = vpack.c.b16 %v702, %v698
    %v995 = vpack.c.b16 %v703, %v699
    %v996 = vpack.c.b16 %v704, %v700
    %v997 = vpack.c.b16 %v709, %v705
    %v998 = vpack.c.b16 %v710, %v706
    %v999 = vpack.c.b16 %v711, %v707
    %v1000 = vpack.c.b16 %v712, %v708
    %v1001 = vpack.c.b16 %v717, %v713
    %v1002 = vpack.c.b16 %v718, %v714
    %v1003 = vpack.c.b16 %v719, %v715
    %v1004 = vpack.c.b16 %v720, %v716
    %v1005 = vpack.c.b16 %v725, %v721
    %v1006 = vpack.c.b16 %v726, %v722
    %v1007 = vpack.c.b16 %v727, %v723
    %v1008 = vpack.c.b16 %v728, %v724
    %v1009 = vpack.c.b16 %v733, %v729
    %v1010 = vpack.c.b16 %v734, %v730
    %v1011 = vpack.c.b16 %v735, %v731
    %v1012 = vpack.c.b16 %v736, %v732
    %v1013 = vpack.c.b16 %v741, %v737
    %v1014 = vpack.c.b16 %v742, %v738
    %v1015 = vpack.c.b16 %v743, %v739
    %v1016 = vpack.c.b16 %v744, %v740
    %v1017 = vpack.c.b16 %v749, %v745
    %v1018 = vpack.c.b16 %v750, %v746
    %v1019 = vpack.c.b16 %v751, %v747
    %v1020 = vpack.c.b16 %v752, %v748
    %v1021 = vpack.c.b16 %v757, %v753
    %v1022 = vpack.c.b16 %v758, %v754
    %v1023 = vpack.c.b16 %v759, %v755
    %v1024 = vpack.c.b16 %v760, %v756
    %v1025 = vpack.c.b16 %v765, %v761
    %v1026 = vpack.c.b16 %v766, %v762
    %v1027 = vpack.c.b16 %v767, %v763
    %v1028 = vpack.c.b16 %v768, %v764
    %v1029 = vpack.c.b16 %v773, %v769
    %v1030 = vpack.c.b16 %v774, %v770
    %v1031 = vpack.c.b16 %v775, %v771
    %v1032 = vpack.c.b16 %v776, %v772
    %v1033 = vpack.c.b16 %v781, %v777
    %v1034 = vpack.c.b16 %v782, %v778
    %v1035 = vpack.c.b16 %v783, %v779
    %v1036 = vpack.c.b16 %v784, %v780
    %v1037 = vpack.c.b16 %v789, %v785
    %v1038 = vpack.c.b16 %v790, %v786
    %v1039 = vpack.c.b16 %v791, %v787
    %v1040 = vpack.c.b16 %v792, %v788
    %v1041 = vpack.c.b16 %v797, %v793
    %v1042 = vpack.c.b16 %v798, %v794
    %v1043 = vpack.c.b16 %v799, %v795
    %v1044 = vpack.c.b16 %v800, %v796
    %v1045 = vpack.c.b16 %v805, %v801
    %v1046 = vpack.c.b16 %v806, %v802
    %v1047 = vpack.c.b16 %v807, %v803
    %v1048 = vpack.c.b16 %v808, %v804
    %v1049 = vpack.c.b16 %v813, %v809
    %v1050 = vpack.c.b16 %v814, %v810
    %v1051 = vpack.c.b16 %v815, %v811
    %v1052 = vpack.c.b16 %v816, %v812
    %v1053 = vpack.c.b16 %v821, %v817
    %v1054 = vpack.c.b16 %v822, %v818
    %v1055 = vpack.c.b16 %v823, %v819
    %v1056 = vpack.c.b16 %v824, %v820
    %v1057 = vpack.c.b16 %v829, %v825
    %v1058 = vpack.c.b16 %v830, %v826
    %v1059 = vpack.c.b16 %v831, %v827
    %v1060 = vpack.c.b16 %v832, %v828
    %v1061 = vpack.c.b16 %v837, %v833
    %v1062 = vpack.c.b16 %v838, %v834
    %v1063 = vpack.c.b16 %v839, %v835
    %v1064 = vpack.c.b16 %v840, %v836
    %v1065 = vpack.c.b16 %v845, %v841
    %v1066 = vpack.c.b16 %v846, %v842
    %v1067 = vpack.c.b16 %v847, %v843
    %v1068 = vpack.c.b16 %v848, %v844
    %v1069 = vpack.c.b16 %v853, %v849
    %v1070 = vpack.c.b16 %v854, %v850
    %v1071 = vpack.c.b16 %v855, %v851
    %v1072 = vpack.c.b16 %v856, %v852
    %v1073 = vpack.c.b16 %v861, %v857
    %v1074 = vpack.c.b16 %v862, %v858
    %v1075 = vpack.c.b16 %v863, %v859
    %v1076 = vpack.c.b16 %v864, %v860
    %v1077 = vpack.c.b16 %v869, %v865
    %v1078 = vpack.c.b16 %v870, %v866
    %v1079 = vpack.c.b16 %v871, %v867
    %v1080 = vpack.c.b16 %v872, %v868
    %v1081 = vpack.c.b16 %v877, %v873
    %v1082 = vpack.c.b16 %v878, %v874
    %v1083 = vpack.c.b16 %v879, %v875
    %v1084 = vpack.c.b16 %v880, %v876
    %v1085 = vpack.c.b16 %v885, %v881
    %v1086 = vpack.c.b16 %v886, %v882
    %v1087 = vpack.c.b16 %v887, %v883
    %v1088 = vpack.c.b16 %v888, %v884
    %v1089 = vpack.c.b16 %v893, %v889
    %v1090 = vpack.c.b16 %v894, %v890
    %v1091 = vpack.c.b16 %v895, %v891
    %v1092 = vpack.c.b16 %v896, %v892
    %vm1289 = vcmask 130048
    %v1291 = vsel %vm1289, %v302, 0
    %1293 = vmatprep.subr.bf16.mxu0 %v926
    %1294 = vmatpush1.bf16.msra.mxu0 %v925
    %1295 = vmatprep.subr.bf16.mxu0 %v922
    %1296 = vmatpush1.bf16.msra.mxu0 %v921
    %1297 = vmatprep.subr.bf16.mxu0 %v918
    %1298 = vmatpush1.bf16.msra.mxu0 %v917
    %1299 = vmatprep.subr.bf16.mxu0 %v914
    %1300 = vmatpush1.bf16.msra.mxu0 %v913
    %1301 = vmatprep.subr.bf16.mxu0 %v910
    %1302 = vmatpush1.bf16.msra.mxu0 %v909
    %1303 = vmatprep.subr.bf16.mxu0 %v906
    %1304 = vmatpush1.bf16.msra.mxu0 %v905
    %1305 = vmatprep.subr.bf16.mxu0 %v902
    %1306 = vmatpush1.bf16.msra.mxu0 %v901
    %1307 = vmatprep.subr.bf16.mxu0 %v898
    %1308 = vmatpush1.bf16.msra.mxu0 %v897
    %1309 = vmatprep.subr.bf16.mxu0 %v958
    %1310 = vmatpush2.bf16.msra.mxu0 %v957
    %1311 = vmatprep.subr.bf16.mxu0 %v954
    %1312 = vmatpush2.bf16.msra.mxu0 %v953
    %1313 = vmatprep.subr.bf16.mxu0 %v950
    %1314 = vmatpush2.bf16.msra.mxu0 %v949
    %1315 = vmatprep.subr.bf16.mxu0 %v946
    %1316 = vmatpush2.bf16.msra.mxu0 %v945
    %1317 = vmatprep.subr.bf16.mxu0 %v942
    %1318 = vmatpush2.bf16.msra.mxu0 %v941
    %1319 = vmatprep.subr.bf16.mxu0 %v938
    %1320 = vmatpush2.bf16.msra.mxu0 %v937
    %1321 = vmatprep.subr.bf16.mxu0 %v934
    %1322 = vmatpush2.bf16.msra.mxu0 %v933
    %1323 = vmatprep.subr.bf16.mxu0 %v930
    %1324 = vmatpush2.bf16.msra.mxu0 %v929
    %1325 = vmatprep.mubr.bf16.mxu0 %v297
    %1326 = vmatmul.mubr.bf16.gmra.mxu0 %v296
    %v1327 = vpop.f32.mrf.mxu0
    %v1328 = vadd.f32 %v268, %v1327
    %v1329 = vpop.f32.mrf.mxu0
    %v1330 = vadd.f32 %v272, %v1329
    %v1331 = vpop.f32.mrf.mxu0
    %v1332 = vpop.f32.mrf.mxu0
    %1333 = vdwg.mxu0
    %1334 = vmatprep.subr.bf16.mxu0 %v990
    %1335 = vmatpush1.bf16.msra.mxu0 %v989
    %1336 = vmatprep.subr.bf16.mxu0 %v986
    %1337 = vmatpush1.bf16.msra.mxu0 %v985
    %1338 = vmatprep.subr.bf16.mxu0 %v982
    %1339 = vmatpush1.bf16.msra.mxu0 %v981
    %1340 = vmatprep.subr.bf16.mxu0 %v978
    %1341 = vmatpush1.bf16.msra.mxu0 %v977
    %1342 = vmatprep.subr.bf16.mxu0 %v974
    %1343 = vmatpush1.bf16.msra.mxu0 %v973
    %1344 = vmatprep.subr.bf16.mxu0 %v970
    %1345 = vmatpush1.bf16.msra.mxu0 %v969
    %1346 = vmatprep.subr.bf16.mxu0 %v966
    %1347 = vmatpush1.bf16.msra.mxu0 %v965
    %1348 = vmatprep.subr.bf16.mxu0 %v962
    %1349 = vmatpush1.bf16.msra.mxu0 %v961
    %1350 = vmatprep.subr.bf16.mxu0 %v1022
    %1351 = vmatpush2.bf16.msra.mxu0 %v1021
    %1352 = vmatprep.subr.bf16.mxu0 %v1018
    %1353 = vmatpush2.bf16.msra.mxu0 %v1017
    %1354 = vmatprep.subr.bf16.mxu0 %v1014
    %1355 = vmatpush2.bf16.msra.mxu0 %v1013
    %1356 = vmatprep.subr.bf16.mxu0 %v1010
    %1357 = vmatpush2.bf16.msra.mxu0 %v1009
    %1358 = vmatprep.subr.bf16.mxu0 %v1006
    %1359 = vmatpush2.bf16.msra.mxu0 %v1005
    %1360 = vmatprep.subr.bf16.mxu0 %v1002
    %1361 = vmatpush2.bf16.msra.mxu0 %v1001
    %1362 = vmatprep.subr.bf16.mxu0 %v998
    %1363 = vmatpush2.bf16.msra.mxu0 %v997
    %1364 = vmatprep.subr.bf16.mxu0 %v994
    %1365 = vmatpush2.bf16.msra.mxu0 %v993
    %1366 = vmatprep.mubr.bf16.mxu0 %v299
    %1367 = vmatmul.mubr.bf16.gmra.mxu0 %v298
    %v1368 = vpop.f32.mrf.mxu0
    %v1369 = vadd.f32 %v1328, %v1368
    %v1370 = vpop.f32.mrf.mxu0
    %v1371 = vadd.f32 %v1330, %v1370
    %v1372 = vpop.f32.mrf.mxu0
    %v1373 = vpop.f32.mrf.mxu0
    %1374 = vdwg.mxu0
    %1375 = vmatprep.subr.bf16.mxu0 %v1054
    %1376 = vmatpush1.bf16.msra.mxu0 %v1053
    %1377 = vmatprep.subr.bf16.mxu0 %v1050
    %1378 = vmatpush1.bf16.msra.mxu0 %v1049
    %1379 = vmatprep.subr.bf16.mxu0 %v1046
    %1380 = vmatpush1.bf16.msra.mxu0 %v1045
    %1381 = vmatprep.subr.bf16.mxu0 %v1042
    %1382 = vmatpush1.bf16.msra.mxu0 %v1041
    %1383 = vmatprep.subr.bf16.mxu0 %v1038
    %1384 = vmatpush1.bf16.msra.mxu0 %v1037
    %1385 = vmatprep.subr.bf16.mxu0 %v1034
    %1386 = vmatpush1.bf16.msra.mxu0 %v1033
    %1387 = vmatprep.subr.bf16.mxu0 %v1030
    %1388 = vmatpush1.bf16.msra.mxu0 %v1029
    %1389 = vmatprep.subr.bf16.mxu0 %v1026
    %1390 = vmatpush1.bf16.msra.mxu0 %v1025
    %1391 = vmatprep.subr.bf16.mxu0 %v1086
    %1392 = vmatpush2.bf16.msra.mxu0 %v1085
    %1393 = vmatprep.subr.bf16.mxu0 %v1082
    %1394 = vmatpush2.bf16.msra.mxu0 %v1081
    %1395 = vmatprep.subr.bf16.mxu0 %v1078
    %1396 = vmatpush2.bf16.msra.mxu0 %v1077
    %1397 = vmatprep.subr.bf16.mxu0 %v1074
    %1398 = vmatpush2.bf16.msra.mxu0 %v1073
    %1399 = vmatprep.subr.bf16.mxu0 %v1070
    %1400 = vmatpush2.bf16.msra.mxu0 %v1069
    %1401 = vmatprep.subr.bf16.mxu0 %v1066
    %1402 = vmatpush2.bf16.msra.mxu0 %v1065
    %1403 = vmatprep.subr.bf16.mxu0 %v1062
    %1404 = vmatpush2.bf16.msra.mxu0 %v1061
    %1405 = vmatprep.subr.bf16.mxu0 %v1058
    %1406 = vmatpush2.bf16.msra.mxu0 %v1057
    %1407 = vmatprep.mubr.bf16.mxu0 %v301
    %1408 = vmatmul.mubr.bf16.gmra.mxu0 %v300
    %v1409 = vpop.f32.mrf.mxu0
    %v1410 = vadd.f32 %v1369, %v1409
    %v1411 = vpop.f32.mrf.mxu0
    %v1412 = vadd.f32 %v1371, %v1411
    %v1413 = vpop.f32.mrf.mxu0
    %v1414 = vpop.f32.mrf.mxu0
    %1415 = vdwg.mxu0
    %1416 = vmatprep.subr.bf16.mxu0 0
    %1417 = vmatpush1.bf16.msra.mxu0 0
    %1418 = vmatprep.subr.bf16.mxu0 0
    %1419 = vmatpush1.bf16.msra.mxu0 0
    %1420 = vmatprep.subr.bf16.mxu0 0
    %1421 = vmatpush1.bf16.msra.mxu0 0
    %1422 = vmatprep.subr.bf16.mxu0 0
    %1423 = vmatpush1.bf16.msra.mxu0 0
    %1424 = vmatprep.subr.bf16.mxu0 0
    %1425 = vmatpush1.bf16.msra.mxu0 0
    %1426 = vmatprep.subr.bf16.mxu0 0
    %1427 = vmatpush1.bf16.msra.mxu0 0
    %1428 = vmatprep.subr.bf16.mxu0 0
    %1429 = vmatpush1.bf16.msra.mxu0 0
    %1430 = vmatprep.subr.bf16.mxu0 %v1090
    %1431 = vmatpush1.bf16.msra.mxu0 %v1089
    %1432 = vmatprep.subr.bf16.mxu0 0
    %1433 = vmatpush2.bf16.msra.mxu0 0
    %1434 = vmatprep.subr.bf16.mxu0 0
    %1435 = vmatpush2.bf16.msra.mxu0 0
    %1436 = vmatprep.subr.bf16.mxu0 0
    %1437 = vmatpush2.bf16.msra.mxu0 0
    %1438 = vmatprep.subr.bf16.mxu0 0
    %1439 = vmatpush2.bf16.msra.mxu0 0
    %1440 = vmatprep.subr.bf16.mxu0 0
    %1441 = vmatpush2.bf16.msra.mxu0 0
    %1442 = vmatprep.subr.bf16.mxu0 0
    %1443 = vmatpush2.bf16.msra.mxu0 0
    %1444 = vmatprep.subr.bf16.mxu0 0
    %1445 = vmatpush2.bf16.msra.mxu0 0
    %1446 = vmatprep.subr.bf16.mxu0 0
    %1447 = vmatpush2.bf16.msra.mxu0 0
    %1448 = vmatprep.mubr.bf16.mxu0 0
    %1449 = vmatmul.mubr.bf16.gmra.mxu0 %v1291
    %v1450 = vpop.f32.mrf.mxu0
    %v1451 = vadd.f32 %v1410, %v1450
    %v1452 = vpop.f32.mrf.mxu0
    %v1453 = vadd.f32 %v1412, %v1452
    %v1454 = vpop.f32.mrf.mxu0
    %v1455 = vpop.f32.mrf.mxu0
    %1456 = vdwg.mxu0
    %1457 = vmatprep.subr.bf16.mxu0 %v928
    %1458 = vmatpush1.bf16.msra.mxu0 %v927
    %1459 = vmatprep.subr.bf16.mxu0 %v924
    %1460 = vmatpush1.bf16.msra.mxu0 %v923
    %1461 = vmatprep.subr.bf16.mxu0 %v920
    %1462 = vmatpush1.bf16.msra.mxu0 %v919
    %1463 = vmatprep.subr.bf16.mxu0 %v916
    %1464 = vmatpush1.bf16.msra.mxu0 %v915
    %1465 = vmatprep.subr.bf16.mxu0 %v912
    %1466 = vmatpush1.bf16.msra.mxu0 %v911
    %1467 = vmatprep.subr.bf16.mxu0 %v908
    %1468 = vmatpush1.bf16.msra.mxu0 %v907
    %1469 = vmatprep.subr.bf16.mxu0 %v904
    %1470 = vmatpush1.bf16.msra.mxu0 %v903
    %1471 = vmatprep.subr.bf16.mxu0 %v900
    %1472 = vmatpush1.bf16.msra.mxu0 %v899
    %1473 = vmatprep.subr.bf16.mxu0 %v960
    %1474 = vmatpush2.bf16.msra.mxu0 %v959
    %1475 = vmatprep.subr.bf16.mxu0 %v956
    %1476 = vmatpush2.bf16.msra.mxu0 %v955
    %1477 = vmatprep.subr.bf16.mxu0 %v952
    %1478 = vmatpush2.bf16.msra.mxu0 %v951
    %1479 = vmatprep.subr.bf16.mxu0 %v948
    %1480 = vmatpush2.bf16.msra.mxu0 %v947
    %1481 = vmatprep.subr.bf16.mxu0 %v944
    %1482 = vmatpush2.bf16.msra.mxu0 %v943
    %1483 = vmatprep.subr.bf16.mxu0 %v940
    %1484 = vmatpush2.bf16.msra.mxu0 %v939
    %1485 = vmatprep.subr.bf16.mxu0 %v936
    %1486 = vmatpush2.bf16.msra.mxu0 %v935
    %1487 = vmatprep.subr.bf16.mxu0 %v932
    %1488 = vmatpush2.bf16.msra.mxu0 %v931
    %1489 = vmatprep.mubr.bf16.mxu0 %v297
    %1490 = vmatmul.mubr.bf16.gmra.mxu0 %v296
    %v1491 = vpop.f32.mrf.mxu0
    %v1492 = vadd.f32 %v276, %v1491
    %v1493 = vpop.f32.mrf.mxu0
    %v1494 = vadd.f32 %v280, %v1493
    %v1495 = vpop.f32.mrf.mxu0
    %v1496 = vpop.f32.mrf.mxu0
    %1497 = vdwg.mxu0
    %1498 = vmatprep.subr.bf16.mxu0 %v992
    %1499 = vmatpush1.bf16.msra.mxu0 %v991
    %1500 = vmatprep.subr.bf16.mxu0 %v988
    %1501 = vmatpush1.bf16.msra.mxu0 %v987
    %1502 = vmatprep.subr.bf16.mxu0 %v984
    %1503 = vmatpush1.bf16.msra.mxu0 %v983
    %1504 = vmatprep.subr.bf16.mxu0 %v980
    %1505 = vmatpush1.bf16.msra.mxu0 %v979
    %1506 = vmatprep.subr.bf16.mxu0 %v976
    %1507 = vmatpush1.bf16.msra.mxu0 %v975
    %1508 = vmatprep.subr.bf16.mxu0 %v972
    %1509 = vmatpush1.bf16.msra.mxu0 %v971
    %1510 = vmatprep.subr.bf16.mxu0 %v968
    %1511 = vmatpush1.bf16.msra.mxu0 %v967
    %1512 = vmatprep.subr.bf16.mxu0 %v964
    %1513 = vmatpush1.bf16.msra.mxu0 %v963
    %1514 = vmatprep.subr.bf16.mxu0 %v1024
    %1515 = vmatpush2.bf16.msra.mxu0 %v1023
    %1516 = vmatprep.subr.bf16.mxu0 %v1020
    %1517 = vmatpush2.bf16.msra.mxu0 %v1019
    %1518 = vmatprep.subr.bf16.mxu0 %v1016
    %1519 = vmatpush2.bf16.msra.mxu0 %v1015
    %1520 = vmatprep.subr.bf16.mxu0 %v1012
    %1521 = vmatpush2.bf16.msra.mxu0 %v1011
    %1522 = vmatprep.subr.bf16.mxu0 %v1008
    %1523 = vmatpush2.bf16.msra.mxu0 %v1007
    %1524 = vmatprep.subr.bf16.mxu0 %v1004
    %1525 = vmatpush2.bf16.msra.mxu0 %v1003
    %1526 = vmatprep.subr.bf16.mxu0 %v1000
    %1527 = vmatpush2.bf16.msra.mxu0 %v999
    %1528 = vmatprep.subr.bf16.mxu0 %v996
    %1529 = vmatpush2.bf16.msra.mxu0 %v995
    %1530 = vmatprep.mubr.bf16.mxu0 %v299
    %1531 = vmatmul.mubr.bf16.gmra.mxu0 %v298
    %v1532 = vpop.f32.mrf.mxu0
    %v1533 = vadd.f32 %v1492, %v1532
    %v1534 = vpop.f32.mrf.mxu0
    %v1535 = vadd.f32 %v1494, %v1534
    %v1536 = vpop.f32.mrf.mxu0
    %v1537 = vpop.f32.mrf.mxu0
    %1538 = vdwg.mxu0
    %1539 = vmatprep.subr.bf16.mxu0 %v1056
    %1540 = vmatpush1.bf16.msra.mxu0 %v1055
    %1541 = vmatprep.subr.bf16.mxu0 %v1052
    %1542 = vmatpush1.bf16.msra.mxu0 %v1051
    %1543 = vmatprep.subr.bf16.mxu0 %v1048
    %1544 = vmatpush1.bf16.msra.mxu0 %v1047
    %1545 = vmatprep.subr.bf16.mxu0 %v1044
    %1546 = vmatpush1.bf16.msra.mxu0 %v1043
    %1547 = vmatprep.subr.bf16.mxu0 %v1040
    %1548 = vmatpush1.bf16.msra.mxu0 %v1039
    %1549 = vmatprep.subr.bf16.mxu0 %v1036
    %1550 = vmatpush1.bf16.msra.mxu0 %v1035
    %1551 = vmatprep.subr.bf16.mxu0 %v1032
    %1552 = vmatpush1.bf16.msra.mxu0 %v1031
    %1553 = vmatprep.subr.bf16.mxu0 %v1028
    %1554 = vmatpush1.bf16.msra.mxu0 %v1027
    %1555 = vmatprep.subr.bf16.mxu0 %v1088
    %1556 = vmatpush2.bf16.msra.mxu0 %v1087
    %1557 = vmatprep.subr.bf16.mxu0 %v1084
    %1558 = vmatpush2.bf16.msra.mxu0 %v1083
    %1559 = vmatprep.subr.bf16.mxu0 %v1080
    %1560 = vmatpush2.bf16.msra.mxu0 %v1079
    %1561 = vmatprep.subr.bf16.mxu0 %v1076
    %1562 = vmatpush2.bf16.msra.mxu0 %v1075
    %1563 = vmatprep.subr.bf16.mxu0 %v1072
    %1564 = vmatpush2.bf16.msra.mxu0 %v1071
    %1565 = vmatprep.subr.bf16.mxu0 %v1068
    %1566 = vmatpush2.bf16.msra.mxu0 %v1067
    %1567 = vmatprep.subr.bf16.mxu0 %v1064
    %1568 = vmatpush2.bf16.msra.mxu0 %v1063
    %1569 = vmatprep.subr.bf16.mxu0 %v1060
    %1570 = vmatpush2.bf16.msra.mxu0 %v1059
    %1571 = vmatprep.mubr.bf16.mxu0 %v301
    %1572 = vmatmul.mubr.bf16.gmra.mxu0 %v300
    %v1573 = vpop.f32.mrf.mxu0
    %v1574 = vadd.f32 %v1533, %v1573
    %v1575 = vpop.f32.mrf.mxu0
    %v1576 = vadd.f32 %v1535, %v1575
    %v1577 = vpop.f32.mrf.mxu0
    %v1578 = vpop.f32.mrf.mxu0
    %1579 = vdwg.mxu0
    %1580 = vmatprep.subr.bf16.mxu0 0
    %1581 = vmatpush1.bf16.msra.mxu0 0
    %1582 = vmatprep.subr.bf16.mxu0 0
    %1583 = vmatpush1.bf16.msra.mxu0 0
    %1584 = vmatprep.subr.bf16.mxu0 0
    %1585 = vmatpush1.bf16.msra.mxu0 0
    %1586 = vmatprep.subr.bf16.mxu0 0
    %1587 = vmatpush1.bf16.msra.mxu0 0
    %1588 = vmatprep.subr.bf16.mxu0 0
    %1589 = vmatpush1.bf16.msra.mxu0 0
    %1590 = vmatprep.subr.bf16.mxu0 0
    %1591 = vmatpush1.bf16.msra.mxu0 0
    %1592 = vmatprep.subr.bf16.mxu0 0
    %1593 = vmatpush1.bf16.msra.mxu0 0
    %1594 = vmatprep.subr.bf16.mxu0 %v1092
    %1595 = vmatpush1.bf16.msra.mxu0 %v1091
    %1596 = vmatprep.subr.bf16.mxu0 0
    %1597 = vmatpush2.bf16.msra.mxu0 0
    %1598 = vmatprep.subr.bf16.mxu0 0
    %1599 = vmatpush2.bf16.msra.mxu0 0
    %1600 = vmatprep.subr.bf16.mxu0 0
    %1601 = vmatpush2.bf16.msra.mxu0 0
    %1602 = vmatprep.subr.bf16.mxu0 0
    %1603 = vmatpush2.bf16.msra.mxu0 0
    %1604 = vmatprep.subr.bf16.mxu0 0
    %1605 = vmatpush2.bf16.msra.mxu0 0
    %1606 = vmatprep.subr.bf16.mxu0 0
    %1607 = vmatpush2.bf16.msra.mxu0 0
    %1608 = vmatprep.subr.bf16.mxu0 0
    %1609 = vmatpush2.bf16.msra.mxu0 0
    %1610 = vmatprep.subr.bf16.mxu0 0
    %1611 = vmatpush2.bf16.msra.mxu0 0
    %1612 = vmatprep.mubr.bf16.mxu0 0
    %1613 = vmatmul.mubr.bf16.gmra.mxu0 %v1291
    %v1614 = vpop.f32.mrf.mxu0
    %v1615 = vadd.f32 %v1574, %v1614
    %v1616 = vpop.f32.mrf.mxu0
    %v1617 = vadd.f32 %v1576, %v1616
    %v1618 = vpop.f32.mrf.mxu0
    %v1619 = vpop.f32.mrf.mxu0
    %1620 = vdwg.mxu0
    %v1621 = vadd.f32 %v63, 1e-07
    %v1622 = vadd.f32 %v64, 1e-07
    %v1623 = vadd.f32 %v65, 1e-07
    %v1624 = vadd.f32 %v66, 1e-07
    %v1625 = vsub.f32 1.0, %v63
    %v1626 = vsub.f32 1.0, %v64
    %v1627 = vsub.f32 1.0, %v65
    %v1628 = vsub.f32 1.0, %v66
    %v1629 = vadd.f32 %v1625, 1e-07
    %v1630 = vadd.f32 %v1626, 1e-07
    %v1631 = vadd.f32 %v1627, 1e-07
    %v1632 = vadd.f32 %v1628, 1e-07
    %v1633 = vrcp.pop %v1629
    %v1634 = vmul.f32 %v1621, %v1633
    %v1635 = vrcp.pop %v1630
    %v1636 = vmul.f32 %v1622, %v1635
    %v1637 = vrcp.pop %v1631
    %v1638 = vmul.f32 %v1623, %v1637
    %v1639 = vrcp.pop %v1632
    %v1640 = vmul.f32 %v1624, %v1639
    %v1641 = vlog2.pop %v1634
    %v1642 = vmul.f32 %v1641, 0.6931472
    %v1643 = vlog2.pop %v1636
    %v1644 = vmul.f32 %v1643, 0.6931472
    %v1645 = vlog2.pop %v1638
    %v1646 = vmul.f32 %v1645, 0.6931472
    %v1647 = vlog2.pop %v1640
    %v1648 = vmul.f32 %v1647, 0.6931472
    %v1649 = vstv %s53
    %v1650 = vadd.f32 %v1649, %v1642
    %v1651 = vadd.f32 %v1649, %v1644
    %v1652 = vadd.f32 %v1649, %v1646
    %v1653 = vadd.f32 %v1649, %v1648
    %v1654 = vmul.f32 %v1650, 5.0
    %v1655 = vmul.f32 %v1651, 5.0
    %v1656 = vmul.f32 %v1652, 5.0
    %v1657 = vmul.f32 %v1653, 5.0
    %v1658 = vtanh.pop %v1654
    %v1659 = vtanh.pop %v1655
    %v1660 = vtanh.pop %v1656
    %v1661 = vtanh.pop %v1657
    %v1662 = vmul.f32 %v1658, 0.5
    %v1663 = vmul.f32 %v1659, 0.5
    %v1664 = vmul.f32 %v1660, 0.5
    %v1665 = vmul.f32 %v1661, 0.5
    %v1666 = vsub.f32 0.5, %v1662
    %v1667 = vsub.f32 0.5, %v1663
    %v1668 = vsub.f32 0.5, %v1664
    %v1669 = vsub.f32 0.5, %v1665
    %v1670 = vmul.f32 %v1451, %v1666
    %v1671 = vmul.f32 %v1453, %v1667
    %v1672 = vmul.f32 %v1615, %v1668
    %v1673 = vmul.f32 %v1617, %v1669
    %v1674 = vstv %s54
    %v1675 = vmul.f32 %v1670, %v1674
    %v1676 = vmul.f32 %v1671, %v1674
    %v1677 = vmul.f32 %v1672, %v1674
    %v1678 = vmul.f32 %v1673, %v1674
    %v1679 = vmax.f32 %v1675, 0.0
    %v1680 = vmax.f32 %v1676, 0.0
    %v1681 = vmax.f32 %v1677, 0.0
    %v1682 = vmax.f32 %v1678, 0.0
    %v1683 = vpack.c.bf16 %v1679, %v1679
    %v1684 = vpack.c.bf16 %v1680, %v1680
    %v1685 = vpack.c.bf16 %v1681, %v1681
    %v1686 = vpack.c.bf16 %v1682, %v1682
    %v1687 = vld [vmem:[%s3] sm:$0xff]
    %v1688 = vld [vmem:[%s3 + $0x8] sm:$0xff]
    %v1689 = vld [vmem:[%s3 + $0x10] sm:$0xff]
    %v1690 = vld [vmem:[%s3 + $0x18] sm:$0xff]
    %v1691 = vld [vmem:[%s3 + $0x20] sm:$0xff]
    %v1692 = vld [vmem:[%s7] sm:$0xff]
    %v1693 = vld [vmem:[%s7 + $0x8] sm:$0xff]
    %v1694 = vld [vmem:[%s7 + $0x10] sm:$0xf]
    %v1695 = vld [vmem:[%s7 + $0x14] sm:$0xff]
    %v1696 = vld [vmem:[%s7 + $0x1c] sm:$0xff]
    %v1697 = vld [vmem:[%s7 + $0x24] sm:$0xf]
    %v1698 = vld [vmem:[%s7 + $0x28] sm:$0xff]
    %v1699 = vld [vmem:[%s7 + $0x30] sm:$0xff]
    %v1700 = vld [vmem:[%s7 + $0x38] sm:$0xf]
    %v1701 = vld [vmem:[%s7 + $0x3c] sm:$0xff]
    %v1702 = vld [vmem:[%s7 + $0x44] sm:$0xff]
    %v1703 = vld [vmem:[%s7 + $0x4c] sm:$0xf]
    %v1704 = vld [vmem:[%s7 + $0x50] sm:$0xff]
    %v1705 = vld [vmem:[%s7 + $0x58] sm:$0xff]
    %v1706 = vld [vmem:[%s7 + $0x60] sm:$0xf]
    %v1707 = vld [vmem:[%s7 + $0x64] sm:$0xff]
    %v1708 = vld [vmem:[%s7 + $0x6c] sm:$0xff]
    %v1709 = vld [vmem:[%s7 + $0x74] sm:$0xf]
    %v1710 = vld [vmem:[%s7 + $0x78] sm:$0xff]
    %v1711 = vld [vmem:[%s7 + $0x80] sm:$0xff]
    %v1712 = vld [vmem:[%s7 + $0x88] sm:$0xf]
    %v1713 = vld [vmem:[%s7 + $0x8c] sm:$0xff]
    %v1714 = vld [vmem:[%s7 + $0x94] sm:$0xff]
    %v1715 = vld [vmem:[%s7 + $0x9c] sm:$0xf]
    %v1716 = vld [vmem:[%s7 + $0xa0] sm:$0xff]
    %v1717 = vld [vmem:[%s7 + $0xa8] sm:$0xff]
    %v1718 = vld [vmem:[%s7 + $0xb0] sm:$0xf]
    %v1719 = vld [vmem:[%s7 + $0xb4] sm:$0xff]
    %v1720 = vld [vmem:[%s7 + $0xbc] sm:$0xff]
    %v1721 = vld [vmem:[%s7 + $0xc4] sm:$0xf]
    %v1722 = vld [vmem:[%s7 + $0xc8] sm:$0xff]
    %v1723 = vld [vmem:[%s7 + $0xd0] sm:$0xff]
    %v1724 = vld [vmem:[%s7 + $0xd8] sm:$0xf]
    %v1725 = vld [vmem:[%s7 + $0xdc] sm:$0xff]
    %v1726 = vld [vmem:[%s7 + $0xe4] sm:$0xff]
    %v1727 = vld [vmem:[%s7 + $0xec] sm:$0xf]
    %v1728 = vld [vmem:[%s7 + $0xf0] sm:$0xff]
    %v1729 = vld [vmem:[%s7 + $0xf8] sm:$0xff]
    %v1730 = vld [vmem:[%s7 + $0x100] sm:$0xf]
    %v1731 = vld [vmem:[%s7 + $0x104] sm:$0xff]
    %v1732 = vld [vmem:[%s7 + $0x10c] sm:$0xff]
    %v1733 = vld [vmem:[%s7 + $0x114] sm:$0xf]
    %v1734 = vld [vmem:[%s7 + $0x118] sm:$0xff]
    %v1735 = vld [vmem:[%s7 + $0x120] sm:$0xff]
    %v1736 = vld [vmem:[%s7 + $0x128] sm:$0xf]
    %v1737 = vld [vmem:[%s7 + $0x12c] sm:$0xff]
    %v1738 = vld [vmem:[%s7 + $0x134] sm:$0xff]
    %v1739 = vld [vmem:[%s7 + $0x13c] sm:$0xf]
    %v1740 = vld [vmem:[%s7 + $0x140] sm:$0xff]
    %v1741 = vld [vmem:[%s7 + $0x148] sm:$0xff]
    %v1742 = vld [vmem:[%s7 + $0x150] sm:$0xf]
    %v1743 = vld [vmem:[%s7 + $0x154] sm:$0xff]
    %v1744 = vld [vmem:[%s7 + $0x15c] sm:$0xff]
    %v1745 = vld [vmem:[%s7 + $0x164] sm:$0xf]
    %v1746 = vld [vmem:[%s7 + $0x168] sm:$0xff]
    %v1747 = vld [vmem:[%s7 + $0x170] sm:$0xff]
    %v1748 = vld [vmem:[%s7 + $0x178] sm:$0xf]
    %v1749 = vld [vmem:[%s7 + $0x17c] sm:$0xff]
    %v1750 = vld [vmem:[%s7 + $0x184] sm:$0xff]
    %v1751 = vld [vmem:[%s7 + $0x18c] sm:$0xf]
    %v1752 = vld [vmem:[%s7 + $0x190] sm:$0xff]
    %v1753 = vld [vmem:[%s7 + $0x198] sm:$0xff]
    %v1754 = vld [vmem:[%s7 + $0x1a0] sm:$0xf]
    %v1755 = vld [vmem:[%s7 + $0x1a4] sm:$0xff]
    %v1756 = vld [vmem:[%s7 + $0x1ac] sm:$0xff]
    %v1757 = vld [vmem:[%s7 + $0x1b4] sm:$0xf]
    %v1758 = vld [vmem:[%s7 + $0x1b8] sm:$0xff]
    %v1759 = vld [vmem:[%s7 + $0x1c0] sm:$0xff]
    %v1760 = vld [vmem:[%s7 + $0x1c8] sm:$0xf]
    %v1761 = vld [vmem:[%s7 + $0x1cc] sm:$0xff]
    %v1762 = vld [vmem:[%s7 + $0x1d4] sm:$0xff]
    %v1763 = vld [vmem:[%s7 + $0x1dc] sm:$0xf]
    %v1764 = vld [vmem:[%s7 + $0x1e0] sm:$0xff]
    %v1765 = vld [vmem:[%s7 + $0x1e8] sm:$0xff]
    %v1766 = vld [vmem:[%s7 + $0x1f0] sm:$0xf]
    %v1767 = vld [vmem:[%s7 + $0x1f4] sm:$0xff]
    %v1768 = vld [vmem:[%s7 + $0x1fc] sm:$0xff]
    %v1769 = vld [vmem:[%s7 + $0x204] sm:$0xf]
    %v1770 = vld [vmem:[%s7 + $0x208] sm:$0xff]
    %v1771 = vld [vmem:[%s7 + $0x210] sm:$0xff]
    %v1772 = vld [vmem:[%s7 + $0x218] sm:$0xf]
    %v1773 = vld [vmem:[%s7 + $0x21c] sm:$0xff]
    %v1774 = vld [vmem:[%s7 + $0x224] sm:$0xff]
    %v1775 = vld [vmem:[%s7 + $0x22c] sm:$0xf]
    %v1776 = vld [vmem:[%s7 + $0x230] sm:$0xff]
    %v1777 = vld [vmem:[%s7 + $0x238] sm:$0xff]
    %v1778 = vld [vmem:[%s7 + $0x240] sm:$0xf]
    %v1779 = vld [vmem:[%s7 + $0x244] sm:$0xff]
    %v1780 = vld [vmem:[%s7 + $0x24c] sm:$0xff]
    %v1781 = vld [vmem:[%s7 + $0x254] sm:$0xf]
    %v1782 = vld [vmem:[%s7 + $0x258] sm:$0xff]
    %v1783 = vld [vmem:[%s7 + $0x260] sm:$0xff]
    %v1784 = vld [vmem:[%s7 + $0x268] sm:$0xf]
    %v1785 = vld [vmem:[%s7 + $0x26c] sm:$0xff]
    %v1786 = vld [vmem:[%s7 + $0x274] sm:$0xff]
    %v1787 = vld [vmem:[%s7 + $0x27c] sm:$0xf]
    %v1788 = vld [vmem:[%s7 + $0x280] sm:$0xff]
    %v1789 = vld [vmem:[%s7 + $0x288] sm:$0xff]
    %v1790 = vld [vmem:[%s7 + $0x290] sm:$0xf]
    %v1791 = vld [vmem:[%s7 + $0x294] sm:$0xff]
    %v1792 = vld [vmem:[%s7 + $0x29c] sm:$0xff]
    %v1793 = vld [vmem:[%s7 + $0x2a4] sm:$0xf]
    %v1794 = vld [vmem:[%s7 + $0x2a8] sm:$0xff]
    %v1795 = vld [vmem:[%s7 + $0x2b0] sm:$0xff]
    %v1796 = vld [vmem:[%s7 + $0x2b8] sm:$0xf]
    %v1797 = vld [vmem:[%s7 + $0x2bc] sm:$0xff]
    %v1798 = vld [vmem:[%s7 + $0x2c4] sm:$0xff]
    %v1799 = vld [vmem:[%s7 + $0x2cc] sm:$0xf]
    %v1800 = vld [vmem:[%s7 + $0x2d0] sm:$0xff]
    %v1801 = vld [vmem:[%s7 + $0x2d8] sm:$0xff]
    %v1802 = vld [vmem:[%s7 + $0x2e0] sm:$0xf]
    %v1803 = vld [vmem:[%s7 + $0x2e4] sm:$0xff]
    %v1804 = vld [vmem:[%s7 + $0x2ec] sm:$0xff]
    %v1805 = vld [vmem:[%s7 + $0x2f4] sm:$0xf]
    %v1806 = vld [vmem:[%s7 + $0x2f8] sm:$0xff]
    %v1807 = vld [vmem:[%s7 + $0x300] sm:$0xff]
    %v1808 = vld [vmem:[%s7 + $0x308] sm:$0xf]
    %v1809 = vld [vmem:[%s7 + $0x30c] sm:$0xff]
    %v1810 = vld [vmem:[%s7 + $0x314] sm:$0xff]
    %v1811 = vld [vmem:[%s7 + $0x31c] sm:$0xf]
    %v1812 = vld [vmem:[%s7 + $0x320] sm:$0xff]
    %v1813 = vld [vmem:[%s7 + $0x328] sm:$0xff]
    %v1814 = vld [vmem:[%s7 + $0x330] sm:$0xf]
    %v1815 = vld [vmem:[%s7 + $0x334] sm:$0xff]
    %v1816 = vld [vmem:[%s7 + $0x33c] sm:$0xff]
    %v1817 = vld [vmem:[%s7 + $0x344] sm:$0xf]
    %v1818 = vld [vmem:[%s7 + $0x348] sm:$0xff]
    %v1819 = vld [vmem:[%s7 + $0x350] sm:$0xff]
    %v1820 = vld [vmem:[%s7 + $0x358] sm:$0xf]
    %v1821 = vld [vmem:[%s7 + $0x35c] sm:$0xff]
    %v1822 = vld [vmem:[%s7 + $0x364] sm:$0xff]
    %v1823 = vld [vmem:[%s7 + $0x36c] sm:$0xf]
    %v1824 = vld [vmem:[%s7 + $0x370] sm:$0xff]
    %v1825 = vld [vmem:[%s7 + $0x378] sm:$0xff]
    %v1826 = vld [vmem:[%s7 + $0x380] sm:$0xf]
    %v1827 = vld [vmem:[%s7 + $0x384] sm:$0xff]
    %v1828 = vld [vmem:[%s7 + $0x38c] sm:$0xff]
    %v1829 = vld [vmem:[%s7 + $0x394] sm:$0xf]
    %v1830 = vld [vmem:[%s7 + $0x398] sm:$0xff]
    %v1831 = vld [vmem:[%s7 + $0x3a0] sm:$0xff]
    %v1832 = vld [vmem:[%s7 + $0x3a8] sm:$0xf]
    %v1833 = vld [vmem:[%s7 + $0x3ac] sm:$0xff]
    %v1834 = vld [vmem:[%s7 + $0x3b4] sm:$0xff]
    %v1835 = vld [vmem:[%s7 + $0x3bc] sm:$0xf]
    %v1836 = vld [vmem:[%s7 + $0x3c0] sm:$0xff]
    %v1837 = vld [vmem:[%s7 + $0x3c8] sm:$0xff]
    %v1838 = vld [vmem:[%s7 + $0x3d0] sm:$0xf]
    %v1839 = vld [vmem:[%s7 + $0x3d4] sm:$0xff]
    %v1840 = vld [vmem:[%s7 + $0x3dc] sm:$0xff]
    %v1841 = vld [vmem:[%s7 + $0x3e4] sm:$0xf]
    %v1842 = vld [vmem:[%s8] sm:$0x1f]
    %v1844 = vlaneseq
    %v1845 = vshrl.u32 %v1844, 7
    %v1846 = vsub.s32 0, %v1845
    %v1847 = vrot.slane %v1842, %v1846
    %v1848 = vlaneseq
    %v1849 = vshrl.u32 %v1848, 7
    %v1850 = vsub.s32 1, %v1849
    %v1851 = vrot.slane %v1842, %v1850
    %v1852 = vlaneseq
    %v1853 = vshrl.u32 %v1852, 7
    %v1854 = vsub.s32 2, %v1853
    %v1855 = vrot.slane %v1842, %v1854
    %v1856 = vlaneseq
    %v1857 = vshrl.u32 %v1856, 7
    %v1858 = vsub.s32 3, %v1857
    %v1859 = vrot.slane %v1842, %v1858
    %v1860 = vlaneseq
    %v1861 = vshrl.u32 %v1860, 7
    %v1862 = vsub.s32 4, %v1861
    %v1863 = vrot.slane %v1842, %v1862
    %v2019 = vunpack.c.l.b16 %v1692
    %v2020 = vunpack.c.h.b16 %v1692
    %v2021 = vunpack.c.l.b16 %v1693
    %v2022 = vunpack.c.h.b16 %v1693
    %v2023 = vunpack.c.l.b16 %v1694
    %v2024 = vunpack.c.l.b16 %v1695
    %v2025 = vunpack.c.h.b16 %v1695
    %v2026 = vunpack.c.l.b16 %v1696
    %v2027 = vunpack.c.h.b16 %v1696
    %v2028 = vunpack.c.l.b16 %v1697
    %v2029 = vunpack.c.l.b16 %v1698
    %v2030 = vunpack.c.h.b16 %v1698
    %v2031 = vunpack.c.l.b16 %v1699
    %v2032 = vunpack.c.h.b16 %v1699
    %v2033 = vunpack.c.l.b16 %v1700
    %v2034 = vunpack.c.l.b16 %v1701
    %v2035 = vunpack.c.h.b16 %v1701
    %v2036 = vunpack.c.l.b16 %v1702
    %v2037 = vunpack.c.h.b16 %v1702
    %v2038 = vunpack.c.l.b16 %v1703
    %v2039 = vunpack.c.l.b16 %v1704
    %v2040 = vunpack.c.h.b16 %v1704
    %v2041 = vunpack.c.l.b16 %v1705
    %v2042 = vunpack.c.h.b16 %v1705
    %v2043 = vunpack.c.l.b16 %v1706
    %v2044 = vunpack.c.l.b16 %v1707
    %v2045 = vunpack.c.h.b16 %v1707
    %v2046 = vunpack.c.l.b16 %v1708
    %v2047 = vunpack.c.h.b16 %v1708
    %v2048 = vunpack.c.l.b16 %v1709
    %v2049 = vunpack.c.l.b16 %v1710
    %v2050 = vunpack.c.h.b16 %v1710
    %v2051 = vunpack.c.l.b16 %v1711
    %v2052 = vunpack.c.h.b16 %v1711
    %v2053 = vunpack.c.l.b16 %v1712
    %v2054 = vunpack.c.l.b16 %v1713
    %v2055 = vunpack.c.h.b16 %v1713
    %v2056 = vunpack.c.l.b16 %v1714
    %v2057 = vunpack.c.h.b16 %v1714
    %v2058 = vunpack.c.l.b16 %v1715
    %v2059 = vunpack.c.l.b16 %v1716
    %v2060 = vunpack.c.h.b16 %v1716
    %v2061 = vunpack.c.l.b16 %v1717
    %v2062 = vunpack.c.h.b16 %v1717
    %v2063 = vunpack.c.l.b16 %v1718
    %v2064 = vunpack.c.l.b16 %v1719
    %v2065 = vunpack.c.h.b16 %v1719
    %v2066 = vunpack.c.l.b16 %v1720
    %v2067 = vunpack.c.h.b16 %v1720
    %v2068 = vunpack.c.l.b16 %v1721
    %v2069 = vunpack.c.l.b16 %v1722
    %v2070 = vunpack.c.h.b16 %v1722
    %v2071 = vunpack.c.l.b16 %v1723
    %v2072 = vunpack.c.h.b16 %v1723
    %v2073 = vunpack.c.l.b16 %v1724
    %v2074 = vunpack.c.l.b16 %v1725
    %v2075 = vunpack.c.h.b16 %v1725
    %v2076 = vunpack.c.l.b16 %v1726
    %v2077 = vunpack.c.h.b16 %v1726
    %v2078 = vunpack.c.l.b16 %v1727
    %v2079 = vunpack.c.l.b16 %v1728
    %v2080 = vunpack.c.h.b16 %v1728
    %v2081 = vunpack.c.l.b16 %v1729
    %v2082 = vunpack.c.h.b16 %v1729
    %v2083 = vunpack.c.l.b16 %v1730
    %v2084 = vunpack.c.l.b16 %v1731
    %v2085 = vunpack.c.h.b16 %v1731
    %v2086 = vunpack.c.l.b16 %v1732
    %v2087 = vunpack.c.h.b16 %v1732
    %v2088 = vunpack.c.l.b16 %v1733
    %v2089 = vunpack.c.l.b16 %v1734
    %v2090 = vunpack.c.h.b16 %v1734
    %v2091 = vunpack.c.l.b16 %v1735
    %v2092 = vunpack.c.h.b16 %v1735
    %v2093 = vunpack.c.l.b16 %v1736
    %v2094 = vunpack.c.l.b16 %v1737
    %v2095 = vunpack.c.h.b16 %v1737
    %v2096 = vunpack.c.l.b16 %v1738
    %v2097 = vunpack.c.h.b16 %v1738
    %v2098 = vunpack.c.l.b16 %v1739
    %v2099 = vunpack.c.l.b16 %v1740
    %v2100 = vunpack.c.h.b16 %v1740
    %v2101 = vunpack.c.l.b16 %v1741
    %v2102 = vunpack.c.h.b16 %v1741
    %v2103 = vunpack.c.l.b16 %v1742
    %v2104 = vunpack.c.l.b16 %v1743
    %v2105 = vunpack.c.h.b16 %v1743
    %v2106 = vunpack.c.l.b16 %v1744
    %v2107 = vunpack.c.h.b16 %v1744
    %v2108 = vunpack.c.l.b16 %v1745
    %v2109 = vunpack.c.l.b16 %v1746
    %v2110 = vunpack.c.h.b16 %v1746
    %v2111 = vunpack.c.l.b16 %v1747
    %v2112 = vunpack.c.h.b16 %v1747
    %v2113 = vunpack.c.l.b16 %v1748
    %v2114 = vunpack.c.l.b16 %v1749
    %v2115 = vunpack.c.h.b16 %v1749
    %v2116 = vunpack.c.l.b16 %v1750
    %v2117 = vunpack.c.h.b16 %v1750
    %v2118 = vunpack.c.l.b16 %v1751
    %v2119 = vunpack.c.l.b16 %v1752
    %v2120 = vunpack.c.h.b16 %v1752
    %v2121 = vunpack.c.l.b16 %v1753
    %v2122 = vunpack.c.h.b16 %v1753
    %v2123 = vunpack.c.l.b16 %v1754
    %v2124 = vunpack.c.l.b16 %v1755
    %v2125 = vunpack.c.h.b16 %v1755
    %v2126 = vunpack.c.l.b16 %v1756
    %v2127 = vunpack.c.h.b16 %v1756
    %v2128 = vunpack.c.l.b16 %v1757
    %v2129 = vunpack.c.l.b16 %v1758
    %v2130 = vunpack.c.h.b16 %v1758
    %v2131 = vunpack.c.l.b16 %v1759
    %v2132 = vunpack.c.h.b16 %v1759
    %v2133 = vunpack.c.l.b16 %v1760
    %v2134 = vunpack.c.l.b16 %v1761
    %v2135 = vunpack.c.h.b16 %v1761
    %v2136 = vunpack.c.l.b16 %v1762
    %v2137 = vunpack.c.h.b16 %v1762
    %v2138 = vunpack.c.l.b16 %v1763
    %v2139 = vunpack.c.l.b16 %v1764
    %v2140 = vunpack.c.h.b16 %v1764
    %v2141 = vunpack.c.l.b16 %v1765
    %v2142 = vunpack.c.h.b16 %v1765
    %v2143 = vunpack.c.l.b16 %v1766
    %v2144 = vunpack.c.l.b16 %v1767
    %v2145 = vunpack.c.h.b16 %v1767
    %v2146 = vunpack.c.l.b16 %v1768
    %v2147 = vunpack.c.h.b16 %v1768
    %v2148 = vunpack.c.l.b16 %v1769
    %v2149 = vunpack.c.l.b16 %v1770
    %v2150 = vunpack.c.h.b16 %v1770
    %v2151 = vunpack.c.l.b16 %v1771
    %v2152 = vunpack.c.h.b16 %v1771
    %v2153 = vunpack.c.l.b16 %v1772
    %v2154 = vunpack.c.l.b16 %v1773
    %v2155 = vunpack.c.h.b16 %v1773
    %v2156 = vunpack.c.l.b16 %v1774
    %v2157 = vunpack.c.h.b16 %v1774
    %v2158 = vunpack.c.l.b16 %v1775
    %v2159 = vunpack.c.l.b16 %v1776
    %v2160 = vunpack.c.h.b16 %v1776
    %v2161 = vunpack.c.l.b16 %v1777
    %v2162 = vunpack.c.h.b16 %v1777
    %v2163 = vunpack.c.l.b16 %v1778
    %v2164 = vunpack.c.l.b16 %v1779
    %v2165 = vunpack.c.h.b16 %v1779
    %v2166 = vunpack.c.l.b16 %v1780
    %v2167 = vunpack.c.h.b16 %v1780
    %v2168 = vunpack.c.l.b16 %v1781
    %v2169 = vunpack.c.l.b16 %v1782
    %v2170 = vunpack.c.h.b16 %v1782
    %v2171 = vunpack.c.l.b16 %v1783
    %v2172 = vunpack.c.h.b16 %v1783
    %v2173 = vunpack.c.l.b16 %v1784
    %v2174 = vunpack.c.l.b16 %v1785
    %v2175 = vunpack.c.h.b16 %v1785
    %v2176 = vunpack.c.l.b16 %v1786
    %v2177 = vunpack.c.h.b16 %v1786
    %v2178 = vunpack.c.l.b16 %v1787
    %v2179 = vunpack.c.l.b16 %v1788
    %v2180 = vunpack.c.h.b16 %v1788
    %v2181 = vunpack.c.l.b16 %v1789
    %v2182 = vunpack.c.h.b16 %v1789
    %v2183 = vunpack.c.l.b16 %v1790
    %v2184 = vunpack.c.l.b16 %v1791
    %v2185 = vunpack.c.h.b16 %v1791
    %v2186 = vunpack.c.l.b16 %v1792
    %v2187 = vunpack.c.h.b16 %v1792
    %v2188 = vunpack.c.l.b16 %v1793
    %v2189 = vunpack.c.l.b16 %v1794
    %v2190 = vunpack.c.h.b16 %v1794
    %v2191 = vunpack.c.l.b16 %v1795
    %v2192 = vunpack.c.h.b16 %v1795
    %v2193 = vunpack.c.l.b16 %v1796
    %v2194 = vunpack.c.l.b16 %v1797
    %v2195 = vunpack.c.h.b16 %v1797
    %v2196 = vunpack.c.l.b16 %v1798
    %v2197 = vunpack.c.h.b16 %v1798
    %v2198 = vunpack.c.l.b16 %v1799
    %v2199 = vunpack.c.l.b16 %v1800
    %v2200 = vunpack.c.h.b16 %v1800
    %v2201 = vunpack.c.l.b16 %v1801
    %v2202 = vunpack.c.h.b16 %v1801
    %v2203 = vunpack.c.l.b16 %v1802
    %v2204 = vunpack.c.l.b16 %v1803
    %v2205 = vunpack.c.h.b16 %v1803
    %v2206 = vunpack.c.l.b16 %v1804
    %v2207 = vunpack.c.h.b16 %v1804
    %v2208 = vunpack.c.l.b16 %v1805
    %v2209 = vunpack.c.l.b16 %v1806
    %v2210 = vunpack.c.h.b16 %v1806
    %v2211 = vunpack.c.l.b16 %v1807
    %v2212 = vunpack.c.h.b16 %v1807
    %v2213 = vunpack.c.l.b16 %v1808
    %v2214 = vunpack.c.l.b16 %v1809
    %v2215 = vunpack.c.h.b16 %v1809
    %v2216 = vunpack.c.l.b16 %v1810
    %v2217 = vunpack.c.h.b16 %v1810
    %v2218 = vunpack.c.l.b16 %v1811
    %v2219 = vunpack.c.l.b16 %v1812
    %v2220 = vunpack.c.h.b16 %v1812
    %v2221 = vunpack.c.l.b16 %v1813
    %v2222 = vunpack.c.h.b16 %v1813
    %v2223 = vunpack.c.l.b16 %v1814
    %v2224 = vunpack.c.l.b16 %v1815
    %v2225 = vunpack.c.h.b16 %v1815
    %v2226 = vunpack.c.l.b16 %v1816
    %v2227 = vunpack.c.h.b16 %v1816
    %v2228 = vunpack.c.l.b16 %v1817
    %v2229 = vunpack.c.l.b16 %v1818
    %v2230 = vunpack.c.h.b16 %v1818
    %v2231 = vunpack.c.l.b16 %v1819
    %v2232 = vunpack.c.h.b16 %v1819
    %v2233 = vunpack.c.l.b16 %v1820
    %v2234 = vunpack.c.l.b16 %v1821
    %v2235 = vunpack.c.h.b16 %v1821
    %v2236 = vunpack.c.l.b16 %v1822
    %v2237 = vunpack.c.h.b16 %v1822
    %v2238 = vunpack.c.l.b16 %v1823
    %v2239 = vunpack.c.l.b16 %v1824
    %v2240 = vunpack.c.h.b16 %v1824
    %v2241 = vunpack.c.l.b16 %v1825
    %v2242 = vunpack.c.h.b16 %v1825
    %v2243 = vunpack.c.l.b16 %v1826
    %v2244 = vunpack.c.l.b16 %v1827
    %v2245 = vunpack.c.h.b16 %v1827
    %v2246 = vunpack.c.l.b16 %v1828
    %v2247 = vunpack.c.h.b16 %v1828
    %v2248 = vunpack.c.l.b16 %v1829
    %v2249 = vunpack.c.l.b16 %v1830
    %v2250 = vunpack.c.h.b16 %v1830
    %v2251 = vunpack.c.l.b16 %v1831
    %v2252 = vunpack.c.h.b16 %v1831
    %v2253 = vunpack.c.l.b16 %v1832
    %v2254 = vunpack.c.l.b16 %v1833
    %v2255 = vunpack.c.h.b16 %v1833
    %v2256 = vunpack.c.l.b16 %v1834
    %v2257 = vunpack.c.h.b16 %v1834
    %v2258 = vunpack.c.l.b16 %v1835
    %v2259 = vunpack.c.l.b16 %v1836
    %v2260 = vunpack.c.h.b16 %v1836
    %v2261 = vunpack.c.l.b16 %v1837
    %v2262 = vunpack.c.h.b16 %v1837
    %v2263 = vunpack.c.l.b16 %v1838
    %v2264 = vunpack.c.l.b16 %v1839
    %v2265 = vunpack.c.h.b16 %v1839
    %v2266 = vunpack.c.l.b16 %v1840
    %v2267 = vunpack.c.h.b16 %v1840
    %v2268 = vunpack.c.l.b16 %v1841
    %v2269 = vpack.c.b16 %v2024, %v2019
    %v2270 = vpack.c.b16 %v2025, %v2020
    %v2271 = vpack.c.b16 %v2026, %v2021
    %v2272 = vpack.c.b16 %v2027, %v2022
    %v2273 = vpack.c.b16 %v2028, %v2023
    %v2274 = vpack.c.b16 %v2034, %v2029
    %v2275 = vpack.c.b16 %v2035, %v2030
    %v2276 = vpack.c.b16 %v2036, %v2031
    %v2277 = vpack.c.b16 %v2037, %v2032
    %v2278 = vpack.c.b16 %v2038, %v2033
    %v2279 = vpack.c.b16 %v2044, %v2039
    %v2280 = vpack.c.b16 %v2045, %v2040
    %v2281 = vpack.c.b16 %v2046, %v2041
    %v2282 = vpack.c.b16 %v2047, %v2042
    %v2283 = vpack.c.b16 %v2048, %v2043
    %v2284 = vpack.c.b16 %v2054, %v2049
    %v2285 = vpack.c.b16 %v2055, %v2050
    %v2286 = vpack.c.b16 %v2056, %v2051
    %v2287 = vpack.c.b16 %v2057, %v2052
    %v2288 = vpack.c.b16 %v2058, %v2053
    %v2289 = vpack.c.b16 %v2064, %v2059
    %v2290 = vpack.c.b16 %v2065, %v2060
    %v2291 = vpack.c.b16 %v2066, %v2061
    %v2292 = vpack.c.b16 %v2067, %v2062
    %v2293 = vpack.c.b16 %v2068, %v2063
    %v2294 = vpack.c.b16 %v2074, %v2069
    %v2295 = vpack.c.b16 %v2075, %v2070
    %v2296 = vpack.c.b16 %v2076, %v2071
    %v2297 = vpack.c.b16 %v2077, %v2072
    %v2298 = vpack.c.b16 %v2078, %v2073
    %v2299 = vpack.c.b16 %v2084, %v2079
    %v2300 = vpack.c.b16 %v2085, %v2080
    %v2301 = vpack.c.b16 %v2086, %v2081
    %v2302 = vpack.c.b16 %v2087, %v2082
    %v2303 = vpack.c.b16 %v2088, %v2083
    %v2304 = vpack.c.b16 %v2094, %v2089
    %v2305 = vpack.c.b16 %v2095, %v2090
    %v2306 = vpack.c.b16 %v2096, %v2091
    %v2307 = vpack.c.b16 %v2097, %v2092
    %v2308 = vpack.c.b16 %v2098, %v2093
    %v2309 = vpack.c.b16 %v2104, %v2099
    %v2310 = vpack.c.b16 %v2105, %v2100
    %v2311 = vpack.c.b16 %v2106, %v2101
    %v2312 = vpack.c.b16 %v2107, %v2102
    %v2313 = vpack.c.b16 %v2108, %v2103
    %v2314 = vpack.c.b16 %v2114, %v2109
    %v2315 = vpack.c.b16 %v2115, %v2110
    %v2316 = vpack.c.b16 %v2116, %v2111
    %v2317 = vpack.c.b16 %v2117, %v2112
    %v2318 = vpack.c.b16 %v2118, %v2113
    %v2319 = vpack.c.b16 %v2124, %v2119
    %v2320 = vpack.c.b16 %v2125, %v2120
    %v2321 = vpack.c.b16 %v2126, %v2121
    %v2322 = vpack.c.b16 %v2127, %v2122
    %v2323 = vpack.c.b16 %v2128, %v2123
    %v2324 = vpack.c.b16 %v2134, %v2129
    %v2325 = vpack.c.b16 %v2135, %v2130
    %v2326 = vpack.c.b16 %v2136, %v2131
    %v2327 = vpack.c.b16 %v2137, %v2132
    %v2328 = vpack.c.b16 %v2138, %v2133
    %v2329 = vpack.c.b16 %v2144, %v2139
    %v2330 = vpack.c.b16 %v2145, %v2140
    %v2331 = vpack.c.b16 %v2146, %v2141
    %v2332 = vpack.c.b16 %v2147, %v2142
    %v2333 = vpack.c.b16 %v2148, %v2143
    %v2334 = vpack.c.b16 %v2154, %v2149
    %v2335 = vpack.c.b16 %v2155, %v2150
    %v2336 = vpack.c.b16 %v2156, %v2151
    %v2337 = vpack.c.b16 %v2157, %v2152
    %v2338 = vpack.c.b16 %v2158, %v2153
    %v2339 = vpack.c.b16 %v2164, %v2159
    %v2340 = vpack.c.b16 %v2165, %v2160
    %v2341 = vpack.c.b16 %v2166, %v2161
    %v2342 = vpack.c.b16 %v2167, %v2162
    %v2343 = vpack.c.b16 %v2168, %v2163
    %v2344 = vpack.c.b16 %v2174, %v2169
    %v2345 = vpack.c.b16 %v2175, %v2170
    %v2346 = vpack.c.b16 %v2176, %v2171
    %v2347 = vpack.c.b16 %v2177, %v2172
    %v2348 = vpack.c.b16 %v2178, %v2173
    %v2349 = vpack.c.b16 %v2184, %v2179
    %v2350 = vpack.c.b16 %v2185, %v2180
    %v2351 = vpack.c.b16 %v2186, %v2181
    %v2352 = vpack.c.b16 %v2187, %v2182
    %v2353 = vpack.c.b16 %v2188, %v2183
    %v2354 = vpack.c.b16 %v2194, %v2189
    %v2355 = vpack.c.b16 %v2195, %v2190
    %v2356 = vpack.c.b16 %v2196, %v2191
    %v2357 = vpack.c.b16 %v2197, %v2192
    %v2358 = vpack.c.b16 %v2198, %v2193
    %v2359 = vpack.c.b16 %v2204, %v2199
    %v2360 = vpack.c.b16 %v2205, %v2200
    %v2361 = vpack.c.b16 %v2206, %v2201
    %v2362 = vpack.c.b16 %v2207, %v2202
    %v2363 = vpack.c.b16 %v2208, %v2203
    %v2364 = vpack.c.b16 %v2214, %v2209
    %v2365 = vpack.c.b16 %v2215, %v2210
    %v2366 = vpack.c.b16 %v2216, %v2211
    %v2367 = vpack.c.b16 %v2217, %v2212
    %v2368 = vpack.c.b16 %v2218, %v2213
    %v2369 = vpack.c.b16 %v2224, %v2219
    %v2370 = vpack.c.b16 %v2225, %v2220
    %v2371 = vpack.c.b16 %v2226, %v2221
    %v2372 = vpack.c.b16 %v2227, %v2222
    %v2373 = vpack.c.b16 %v2228, %v2223
    %v2374 = vpack.c.b16 %v2234, %v2229
    %v2375 = vpack.c.b16 %v2235, %v2230
    %v2376 = vpack.c.b16 %v2236, %v2231
    %v2377 = vpack.c.b16 %v2237, %v2232
    %v2378 = vpack.c.b16 %v2238, %v2233
    %v2379 = vpack.c.b16 %v2244, %v2239
    %v2380 = vpack.c.b16 %v2245, %v2240
    %v2381 = vpack.c.b16 %v2246, %v2241
    %v2382 = vpack.c.b16 %v2247, %v2242
    %v2383 = vpack.c.b16 %v2248, %v2243
    %v2384 = vpack.c.b16 %v2254, %v2249
    %v2385 = vpack.c.b16 %v2255, %v2250
    %v2386 = vpack.c.b16 %v2256, %v2251
    %v2387 = vpack.c.b16 %v2257, %v2252
    %v2388 = vpack.c.b16 %v2258, %v2253
    %v2389 = vpack.c.b16 %v2264, %v2259
    %v2390 = vpack.c.b16 %v2265, %v2260
    %v2391 = vpack.c.b16 %v2266, %v2261
    %v2392 = vpack.c.b16 %v2267, %v2262
    %v2393 = vpack.c.b16 %v2268, %v2263
    %v2520 = vsel %vm1289, %v1686, 0
    %2522 = vmatprep.subr.bf16.mxu0 %v2305
    %2523 = vmatpush1.bf16.msra.mxu0 %v2304
    %2524 = vmatprep.subr.bf16.mxu0 %v2300
    %2525 = vmatpush1.bf16.msra.mxu0 %v2299
    %2526 = vmatprep.subr.bf16.mxu0 %v2295
    %2527 = vmatpush1.bf16.msra.mxu0 %v2294
    %2528 = vmatprep.subr.bf16.mxu0 %v2290
    %2529 = vmatpush1.bf16.msra.mxu0 %v2289
    %2530 = vmatprep.subr.bf16.mxu0 %v2285
    %2531 = vmatpush1.bf16.msra.mxu0 %v2284
    %2532 = vmatprep.subr.bf16.mxu0 %v2280
    %2533 = vmatpush1.bf16.msra.mxu0 %v2279
    %2534 = vmatprep.subr.bf16.mxu0 %v2275
    %2535 = vmatpush1.bf16.msra.mxu0 %v2274
    %2536 = vmatprep.subr.bf16.mxu0 %v2270
    %2537 = vmatpush1.bf16.msra.mxu0 %v2269
    %2538 = vmatprep.subr.bf16.mxu0 %v2345
    %2539 = vmatpush2.bf16.msra.mxu0 %v2344
    %2540 = vmatprep.subr.bf16.mxu0 %v2340
    %2541 = vmatpush2.bf16.msra.mxu0 %v2339
    %2542 = vmatprep.subr.bf16.mxu0 %v2335
    %2543 = vmatpush2.bf16.msra.mxu0 %v2334
    %2544 = vmatprep.subr.bf16.mxu0 %v2330
    %2545 = vmatpush2.bf16.msra.mxu0 %v2329
    %2546 = vmatprep.subr.bf16.mxu0 %v2325
    %2547 = vmatpush2.bf16.msra.mxu0 %v2324
    %2548 = vmatprep.subr.bf16.mxu0 %v2320
    %2549 = vmatpush2.bf16.msra.mxu0 %v2319
    %2550 = vmatprep.subr.bf16.mxu0 %v2315
    %2551 = vmatpush2.bf16.msra.mxu0 %v2314
    %2552 = vmatprep.subr.bf16.mxu0 %v2310
    %2553 = vmatpush2.bf16.msra.mxu0 %v2309
    %2554 = vmatprep.mubr.bf16.mxu0 %v1684
    %2555 = vmatmul.mubr.bf16.gmra.mxu0 %v1683
    %v2556 = vpop.f32.mrf.mxu0
    %v2557 = vadd.f32 %v1847, %v2556
    %v2558 = vpop.f32.mrf.mxu0
    %v2559 = vadd.f32 %v1851, %v2558
    %v2560 = vpop.f32.mrf.mxu0
    %v2561 = vpop.f32.mrf.mxu0
    %2562 = vdwg.mxu0
    %2563 = vmatprep.subr.bf16.mxu0 %v2385
    %2564 = vmatpush1.bf16.msra.mxu0 %v2384
    %2565 = vmatprep.subr.bf16.mxu0 %v2380
    %2566 = vmatpush1.bf16.msra.mxu0 %v2379
    %2567 = vmatprep.subr.bf16.mxu0 %v2375
    %2568 = vmatpush1.bf16.msra.mxu0 %v2374
    %2569 = vmatprep.subr.bf16.mxu0 %v2370
    %2570 = vmatpush1.bf16.msra.mxu0 %v2369
    %2571 = vmatprep.subr.bf16.mxu0 %v2365
    %2572 = vmatpush1.bf16.msra.mxu0 %v2364
    %2573 = vmatprep.subr.bf16.mxu0 %v2360
    %2574 = vmatpush1.bf16.msra.mxu0 %v2359
    %2575 = vmatprep.subr.bf16.mxu0 %v2355
    %2576 = vmatpush1.bf16.msra.mxu0 %v2354
    %2577 = vmatprep.subr.bf16.mxu0 %v2350
    %2578 = vmatpush1.bf16.msra.mxu0 %v2349
    %2579 = vmatprep.subr.bf16.mxu0 0
    %2580 = vmatpush2.bf16.msra.mxu0 0
    %2581 = vmatprep.subr.bf16.mxu0 0
    %2582 = vmatpush2.bf16.msra.mxu0 0
    %2583 = vmatprep.subr.bf16.mxu0 0
    %2584 = vmatpush2.bf16.msra.mxu0 0
    %2585 = vmatprep.subr.bf16.mxu0 0
    %2586 = vmatpush2.bf16.msra.mxu0 0
    %2587 = vmatprep.subr.bf16.mxu0 0
    %2588 = vmatpush2.bf16.msra.mxu0 0
    %2589 = vmatprep.subr.bf16.mxu0 0
    %2590 = vmatpush2.bf16.msra.mxu0 0
    %2591 = vmatprep.subr.bf16.mxu0 0
    %2592 = vmatpush2.bf16.msra.mxu0 0
    %2593 = vmatprep.subr.bf16.mxu0 %v2390
    %2594 = vmatpush2.bf16.msra.mxu0 %v2389
    %2595 = vmatprep.mubr.bf16.mxu0 %v2520
    %2596 = vmatmul.mubr.bf16.gmra.mxu0 %v1685
    %v2597 = vpop.f32.mrf.mxu0
    %v2598 = vadd.f32 %v2557, %v2597
    %v2599 = vpop.f32.mrf.mxu0
    %v2600 = vadd.f32 %v2559, %v2599
    %v2601 = vpop.f32.mrf.mxu0
    %v2602 = vpop.f32.mrf.mxu0
    %2603 = vdwg.mxu0
    %2604 = vmatprep.subr.bf16.mxu0 %v2307
    %2605 = vmatpush1.bf16.msra.mxu0 %v2306
    %2606 = vmatprep.subr.bf16.mxu0 %v2302
    %2607 = vmatpush1.bf16.msra.mxu0 %v2301
    %2608 = vmatprep.subr.bf16.mxu0 %v2297
    %2609 = vmatpush1.bf16.msra.mxu0 %v2296
    %2610 = vmatprep.subr.bf16.mxu0 %v2292
    %2611 = vmatpush1.bf16.msra.mxu0 %v2291
    %2612 = vmatprep.subr.bf16.mxu0 %v2287
    %2613 = vmatpush1.bf16.msra.mxu0 %v2286
    %2614 = vmatprep.subr.bf16.mxu0 %v2282
    %2615 = vmatpush1.bf16.msra.mxu0 %v2281
    %2616 = vmatprep.subr.bf16.mxu0 %v2277
    %2617 = vmatpush1.bf16.msra.mxu0 %v2276
    %2618 = vmatprep.subr.bf16.mxu0 %v2272
    %2619 = vmatpush1.bf16.msra.mxu0 %v2271
    %2620 = vmatprep.subr.bf16.mxu0 %v2347
    %2621 = vmatpush2.bf16.msra.mxu0 %v2346
    %2622 = vmatprep.subr.bf16.mxu0 %v2342
    %2623 = vmatpush2.bf16.msra.mxu0 %v2341
    %2624 = vmatprep.subr.bf16.mxu0 %v2337
    %2625 = vmatpush2.bf16.msra.mxu0 %v2336
    %2626 = vmatprep.subr.bf16.mxu0 %v2332
    %2627 = vmatpush2.bf16.msra.mxu0 %v2331
    %2628 = vmatprep.subr.bf16.mxu0 %v2327
    %2629 = vmatpush2.bf16.msra.mxu0 %v2326
    %2630 = vmatprep.subr.bf16.mxu0 %v2322
    %2631 = vmatpush2.bf16.msra.mxu0 %v2321
    %2632 = vmatprep.subr.bf16.mxu0 %v2317
    %2633 = vmatpush2.bf16.msra.mxu0 %v2316
    %2634 = vmatprep.subr.bf16.mxu0 %v2312
    %2635 = vmatpush2.bf16.msra.mxu0 %v2311
    %2636 = vmatprep.mubr.bf16.mxu0 %v1684
    %2637 = vmatmul.mubr.bf16.gmra.mxu0 %v1683
    %v2638 = vpop.f32.mrf.mxu0
    %v2639 = vadd.f32 %v1855, %v2638
    %v2640 = vpop.f32.mrf.mxu0
    %v2641 = vadd.f32 %v1859, %v2640
    %v2642 = vpop.f32.mrf.mxu0
    %v2643 = vpop.f32.mrf.mxu0
    %2644 = vdwg.mxu0
    %2645 = vmatprep.subr.bf16.mxu0 %v2387
    %2646 = vmatpush1.bf16.msra.mxu0 %v2386
    %2647 = vmatprep.subr.bf16.mxu0 %v2382
    %2648 = vmatpush1.bf16.msra.mxu0 %v2381
    %2649 = vmatprep.subr.bf16.mxu0 %v2377
    %2650 = vmatpush1.bf16.msra.mxu0 %v2376
    %2651 = vmatprep.subr.bf16.mxu0 %v2372
    %2652 = vmatpush1.bf16.msra.mxu0 %v2371
    %2653 = vmatprep.subr.bf16.mxu0 %v2367
    %2654 = vmatpush1.bf16.msra.mxu0 %v2366
    %2655 = vmatprep.subr.bf16.mxu0 %v2362
    %2656 = vmatpush1.bf16.msra.mxu0 %v2361
    %2657 = vmatprep.subr.bf16.mxu0 %v2357
    %2658 = vmatpush1.bf16.msra.mxu0 %v2356
    %2659 = vmatprep.subr.bf16.mxu0 %v2352
    %2660 = vmatpush1.bf16.msra.mxu0 %v2351
    %2661 = vmatprep.subr.bf16.mxu0 0
    %2662 = vmatpush2.bf16.msra.mxu0 0
    %2663 = vmatprep.subr.bf16.mxu0 0
    %2664 = vmatpush2.bf16.msra.mxu0 0
    %2665 = vmatprep.subr.bf16.mxu0 0
    %2666 = vmatpush2.bf16.msra.mxu0 0
    %2667 = vmatprep.subr.bf16.mxu0 0
    %2668 = vmatpush2.bf16.msra.mxu0 0
    %2669 = vmatprep.subr.bf16.mxu0 0
    %2670 = vmatpush2.bf16.msra.mxu0 0
    %2671 = vmatprep.subr.bf16.mxu0 0
    %2672 = vmatpush2.bf16.msra.mxu0 0
    %2673 = vmatprep.subr.bf16.mxu0 0
    %2674 = vmatpush2.bf16.msra.mxu0 0
    %2675 = vmatprep.subr.bf16.mxu0 %v2392
    %2676 = vmatpush2.bf16.msra.mxu0 %v2391
    %2677 = vmatprep.mubr.bf16.mxu0 %v2520
    %2678 = vmatmul.mubr.bf16.gmra.mxu0 %v1685
    %v2679 = vpop.f32.mrf.mxu0
    %v2680 = vadd.f32 %v2639, %v2679
    %v2681 = vpop.f32.mrf.mxu0
    %v2682 = vadd.f32 %v2641, %v2681
    %v2683 = vpop.f32.mrf.mxu0
    %v2684 = vpop.f32.mrf.mxu0
    %2685 = vdwg.mxu0
    %2686 = vmatprep.subr.bf16.mxu0 0
    %2687 = vmatpush1.bf16.msra.mxu0 %v2308
    %2688 = vmatprep.subr.bf16.mxu0 0
    %2689 = vmatpush1.bf16.msra.mxu0 %v2303
    %2690 = vmatprep.subr.bf16.mxu0 0
    %2691 = vmatpush1.bf16.msra.mxu0 %v2298
    %2692 = vmatprep.subr.bf16.mxu0 0
    %2693 = vmatpush1.bf16.msra.mxu0 %v2293
    %2694 = vmatprep.subr.bf16.mxu0 0
    %2695 = vmatpush1.bf16.msra.mxu0 %v2288
    %2696 = vmatprep.subr.bf16.mxu0 0
    %2697 = vmatpush1.bf16.msra.mxu0 %v2283
    %2698 = vmatprep.subr.bf16.mxu0 0
    %2699 = vmatpush1.bf16.msra.mxu0 %v2278
    %2700 = vmatprep.subr.bf16.mxu0 0
    %2701 = vmatpush1.bf16.msra.mxu0 %v2273
    %2702 = vmatprep.subr.bf16.mxu0 0
    %2703 = vmatpush2.bf16.msra.mxu0 %v2348
    %2704 = vmatprep.subr.bf16.mxu0 0
    %2705 = vmatpush2.bf16.msra.mxu0 %v2343
    %2706 = vmatprep.subr.bf16.mxu0 0
    %2707 = vmatpush2.bf16.msra.mxu0 %v2338
    %2708 = vmatprep.subr.bf16.mxu0 0
    %2709 = vmatpush2.bf16.msra.mxu0 %v2333
    %2710 = vmatprep.subr.bf16.mxu0 0
    %2711 = vmatpush2.bf16.msra.mxu0 %v2328
    %2712 = vmatprep.subr.bf16.mxu0 0
    %2713 = vmatpush2.bf16.msra.mxu0 %v2323
    %2714 = vmatprep.subr.bf16.mxu0 0
    %2715 = vmatpush2.bf16.msra.mxu0 %v2318
    %2716 = vmatprep.subr.bf16.mxu0 0
    %2717 = vmatpush2.bf16.msra.mxu0 %v2313
    %2718 = vmatprep.mubr.bf16.mxu0 %v1684
    %2719 = vmatmul.mubr.bf16.gmra.mxu0 %v1683
    %v2720 = vpop.f32.mrf.mxu0
    %v2721 = vadd.f32 %v1863, %v2720
    %v2722 = vpop.f32.mrf.mxu0
    %v2723 = vpop.f32.mrf.mxu0
    %v2724 = vpop.f32.mrf.mxu0
    %2725 = vdwg.mxu0
    %2726 = vmatprep.subr.bf16.mxu0 0
    %2727 = vmatpush1.bf16.msra.mxu0 %v2388
    %2728 = vmatprep.subr.bf16.mxu0 0
    %2729 = vmatpush1.bf16.msra.mxu0 %v2383
    %2730 = vmatprep.subr.bf16.mxu0 0
    %2731 = vmatpush1.bf16.msra.mxu0 %v2378
    %2732 = vmatprep.subr.bf16.mxu0 0
    %2733 = vmatpush1.bf16.msra.mxu0 %v2373
    %2734 = vmatprep.subr.bf16.mxu0 0
    %2735 = vmatpush1.bf16.msra.mxu0 %v2368
    %2736 = vmatprep.subr.bf16.mxu0 0
    %2737 = vmatpush1.bf16.msra.mxu0 %v2363
    %2738 = vmatprep.subr.bf16.mxu0 0
    %2739 = vmatpush1.bf16.msra.mxu0 %v2358
    %2740 = vmatprep.subr.bf16.mxu0 0
    %2741 = vmatpush1.bf16.msra.mxu0 %v2353
    %2742 = vmatprep.subr.bf16.mxu0 0
    %2743 = vmatpush2.bf16.msra.mxu0 0
    %2744 = vmatprep.subr.bf16.mxu0 0
    %2745 = vmatpush2.bf16.msra.mxu0 0
    %2746 = vmatprep.subr.bf16.mxu0 0
    %2747 = vmatpush2.bf16.msra.mxu0 0
    %2748 = vmatprep.subr.bf16.mxu0 0
    %2749 = vmatpush2.bf16.msra.mxu0 0
    %2750 = vmatprep.subr.bf16.mxu0 0
    %2751 = vmatpush2.bf16.msra.mxu0 0
    %2752 = vmatprep.subr.bf16.mxu0 0
    %2753 = vmatpush2.bf16.msra.mxu0 0
    %2754 = vmatprep.subr.bf16.mxu0 0
    %2755 = vmatpush2.bf16.msra.mxu0 0
    %2756 = vmatprep.subr.bf16.mxu0 0
    %2757 = vmatpush2.bf16.msra.mxu0 %v2393
    %2758 = vmatprep.mubr.bf16.mxu0 %v2520
    %2759 = vmatmul.mubr.bf16.gmra.mxu0 %v1685
    %v2760 = vpop.f32.mrf.mxu0
    %v2761 = vadd.f32 %v2721, %v2760
    %v2762 = vpop.f32.mrf.mxu0
    %v2763 = vpop.f32.mrf.mxu0
    %v2764 = vpop.f32.mrf.mxu0
    %2765 = vdwg.mxu0
    %v2766 = vadd.f32 %v1687, 1e-07
    %v2767 = vadd.f32 %v1688, 1e-07
    %v2768 = vadd.f32 %v1689, 1e-07
    %v2769 = vadd.f32 %v1690, 1e-07
    %v2770 = vadd.f32 %v1691, 1e-07
    %v2771 = vsub.f32 1.0, %v1687
    %v2772 = vsub.f32 1.0, %v1688
    %v2773 = vsub.f32 1.0, %v1689
    %v2774 = vsub.f32 1.0, %v1690
    %v2775 = vsub.f32 1.0, %v1691
    %v2776 = vadd.f32 %v2771, 1e-07
    %v2777 = vadd.f32 %v2772, 1e-07
    %v2778 = vadd.f32 %v2773, 1e-07
    %v2779 = vadd.f32 %v2774, 1e-07
    %v2780 = vadd.f32 %v2775, 1e-07
    %v2781 = vrcp.pop %v2776
    %v2782 = vmul.f32 %v2766, %v2781
    %v2783 = vrcp.pop %v2777
    %v2784 = vmul.f32 %v2767, %v2783
    %v2785 = vrcp.pop %v2778
    %v2786 = vmul.f32 %v2768, %v2785
    %v2787 = vrcp.pop %v2779
    %v2788 = vmul.f32 %v2769, %v2787
    %v2789 = vrcp.pop %v2780
    %v2790 = vmul.f32 %v2770, %v2789
    %v2791 = vlog2.pop %v2782
    %v2792 = vmul.f32 %v2791, 0.6931472
    %v2793 = vlog2.pop %v2784
    %v2794 = vmul.f32 %v2793, 0.6931472
    %v2795 = vlog2.pop %v2786
    %v2796 = vmul.f32 %v2795, 0.6931472
    %v2797 = vlog2.pop %v2788
    %v2798 = vmul.f32 %v2797, 0.6931472
    %v2799 = vlog2.pop %v2790
    %v2800 = vmul.f32 %v2799, 0.6931472
    %v2801 = vstv %s55
    %v2802 = vadd.f32 %v2801, %v2792
    %v2803 = vadd.f32 %v2801, %v2794
    %v2804 = vadd.f32 %v2801, %v2796
    %v2805 = vadd.f32 %v2801, %v2798
    %v2806 = vadd.f32 %v2801, %v2800
    %v2807 = vmul.f32 %v2802, 5.0
    %v2808 = vmul.f32 %v2803, 5.0
    %v2809 = vmul.f32 %v2804, 5.0
    %v2810 = vmul.f32 %v2805, 5.0
    %v2811 = vmul.f32 %v2806, 5.0
    %v2812 = vtanh.pop %v2807
    %v2813 = vtanh.pop %v2808
    %v2814 = vtanh.pop %v2809
    %v2815 = vtanh.pop %v2810
    %v2816 = vtanh.pop %v2811
    %v2817 = vmul.f32 %v2812, 0.5
    %v2818 = vmul.f32 %v2813, 0.5
    %v2819 = vmul.f32 %v2814, 0.5
    %v2820 = vmul.f32 %v2815, 0.5
    %v2821 = vmul.f32 %v2816, 0.5
    %v2822 = vsub.f32 0.5, %v2817
    %v2823 = vsub.f32 0.5, %v2818
    %v2824 = vsub.f32 0.5, %v2819
    %v2825 = vsub.f32 0.5, %v2820
    %v2826 = vsub.f32 0.5, %v2821
    %v2827 = vmul.f32 %v2598, %v2822
    %v2828 = vmul.f32 %v2600, %v2823
    %v2829 = vmul.f32 %v2680, %v2824
    %v2830 = vmul.f32 %v2682, %v2825
    %v2831 = vmul.f32 %v2761, %v2826
    %v2832 = vstv %s56
    %v2833 = vmul.f32 %v2827, %v2832
    %v2834 = vmul.f32 %v2828, %v2832
    %v2835 = vmul.f32 %v2829, %v2832
    %v2836 = vmul.f32 %v2830, %v2832
    %v2837 = vmul.f32 %v2831, %v2832
    %v2838 = vmax.f32 %v2833, 0.0
    %v2839 = vmax.f32 %v2834, 0.0
    %v2840 = vmax.f32 %v2835, 0.0
    %v2841 = vmax.f32 %v2836, 0.0
    %v2842 = vmax.f32 %v2837, 0.0
    %v2843 = vpack.c.bf16 %v2838, %v2838
    %v2844 = vpack.c.bf16 %v2839, %v2839
    %v2845 = vpack.c.bf16 %v2840, %v2840
    %v2846 = vpack.c.bf16 %v2841, %v2841
    %v2847 = vpack.c.bf16 %v2842, %v2842
    %v2848 = vld [vmem:[%s4] sm:$0xff]
    %v2849 = vld [vmem:[%s9] sm:$0xf]
    %v2850 = vld [vmem:[%s9 + $0x4] sm:$0xf]
    %v2851 = vld [vmem:[%s9 + $0x8] sm:$0xf]
    %v2852 = vld [vmem:[%s9 + $0xc] sm:$0xf]
    %v2853 = vld [vmem:[%s9 + $0x10] sm:$0xf]
    %v2854 = vld [vmem:[%s9 + $0x14] sm:$0xf]
    %v2855 = vld [vmem:[%s9 + $0x18] sm:$0xf]
    %v2856 = vld [vmem:[%s9 + $0x1c] sm:$0xf]
    %v2857 = vld [vmem:[%s9 + $0x20] sm:$0xf]
    %v2858 = vld [vmem:[%s9 + $0x24] sm:$0xf]
    %v2859 = vld [vmem:[%s9 + $0x28] sm:$0xf]
    %v2860 = vld [vmem:[%s9 + $0x2c] sm:$0xf]
    %v2861 = vld [vmem:[%s9 + $0x30] sm:$0xf]
    %v2862 = vld [vmem:[%s9 + $0x34] sm:$0xf]
    %v2863 = vld [vmem:[%s9 + $0x38] sm:$0xf]
    %v2864 = vld [vmem:[%s9 + $0x3c] sm:$0xf]
    %v2865 = vld [vmem:[%s9 + $0x40] sm:$0xf]
    %v2866 = vld [vmem:[%s9 + $0x44] sm:$0xf]
    %v2867 = vld [vmem:[%s9 + $0x48] sm:$0xf]
    %v2868 = vld [vmem:[%s9 + $0x4c] sm:$0xf]
    %v2869 = vld [vmem:[%s9 + $0x50] sm:$0xf]
    %v2870 = vld [vmem:[%s9 + $0x54] sm:$0xf]
    %v2871 = vld [vmem:[%s9 + $0x58] sm:$0xf]
    %v2872 = vld [vmem:[%s9 + $0x5c] sm:$0xf]
    %v2873 = vld [vmem:[%s9 + $0x60] sm:$0xf]
    %v2874 = vld [vmem:[%s9 + $0x64] sm:$0xf]
    %v2875 = vld [vmem:[%s9 + $0x68] sm:$0xf]
    %v2876 = vld [vmem:[%s9 + $0x6c] sm:$0xf]
    %v2877 = vld [vmem:[%s9 + $0x70] sm:$0xf]
    %v2878 = vld [vmem:[%s9 + $0x74] sm:$0xf]
    %v2879 = vld [vmem:[%s9 + $0x78] sm:$0xf]
    %v2880 = vld [vmem:[%s9 + $0x7c] sm:$0xf]
    %v2881 = vld [vmem:[%s9 + $0x80] sm:$0xf]
    %v2882 = vld [vmem:[%s9 + $0x84] sm:$0xf]
    %v2883 = vld [vmem:[%s9 + $0x88] sm:$0xf]
    %v2884 = vld [vmem:[%s9 + $0x8c] sm:$0xf]
    %v2885 = vld [vmem:[%s9 + $0x90] sm:$0xf]
    %v2886 = vld [vmem:[%s9 + $0x94] sm:$0xf]
    %v2887 = vld [vmem:[%s9 + $0x98] sm:$0xf]
    %v2888 = vld [vmem:[%s9 + $0x9c] sm:$0xf]
    %v2889 = vld [vmem:[%s9 + $0xa0] sm:$0xf]
    %v2890 = vld [vmem:[%s9 + $0xa4] sm:$0xf]
    %v2891 = vld [vmem:[%s9 + $0xa8] sm:$0xf]
    %v2892 = vld [vmem:[%s9 + $0xac] sm:$0xf]
    %v2893 = vld [vmem:[%s9 + $0xb0] sm:$0xf]
    %v2894 = vld [vmem:[%s9 + $0xb4] sm:$0xf]
    %v2895 = vld [vmem:[%s9 + $0xb8] sm:$0xf]
    %v2896 = vld [vmem:[%s9 + $0xbc] sm:$0xf]
    %v2897 = vld [vmem:[%s9 + $0xc0] sm:$0xf]
    %v2898 = vld [vmem:[%s9 + $0xc4] sm:$0xf]
    %v2899 = vld [vmem:[%s9 + $0xc8] sm:$0xf]
    %v2900 = vld [vmem:[%s9 + $0xcc] sm:$0xf]
    %v2901 = vld [vmem:[%s9 + $0xd0] sm:$0xf]
    %v2902 = vld [vmem:[%s9 + $0xd4] sm:$0xf]
    %v2903 = vld [vmem:[%s9 + $0xd8] sm:$0xf]
    %v2904 = vld [vmem:[%s9 + $0xdc] sm:$0xf]
    %v2905 = vld [vmem:[%s9 + $0xe0] sm:$0xf]
    %v2906 = vld [vmem:[%s9 + $0xe4] sm:$0xf]
    %v2907 = vld [vmem:[%s9 + $0xe8] sm:$0xf]
    %v2908 = vld [vmem:[%s9 + $0xec] sm:$0xf]
    %v2909 = vld [vmem:[%s9 + $0xf0] sm:$0xf]
    %v2910 = vld [vmem:[%s9 + $0xf4] sm:$0xf]
    %v2911 = vld [vmem:[%s9 + $0xf8] sm:$0xf]
    %v2912 = vld [vmem:[%s9 + $0xfc] sm:$0xf]
    %v2913 = vld [vmem:[%s9 + $0x100] sm:$0xf]
    %v2914 = vld [vmem:[%s9 + $0x104] sm:$0xf]
    %v2915 = vld [vmem:[%s9 + $0x108] sm:$0xf]
    %v2916 = vld [vmem:[%s9 + $0x10c] sm:$0xf]
    %v2917 = vld [vmem:[%s9 + $0x110] sm:$0xf]
    %v2918 = vld [vmem:[%s9 + $0x114] sm:$0xf]
    %v2919 = vld [vmem:[%s9 + $0x118] sm:$0xf]
    %v2920 = vld [vmem:[%s9 + $0x11c] sm:$0xf]
    %v2921 = vld [vmem:[%s9 + $0x120] sm:$0xf]
    %v2922 = vld [vmem:[%s9 + $0x124] sm:$0xf]
    %v2923 = vld [vmem:[%s9 + $0x128] sm:$0xf]
    %v2924 = vld [vmem:[%s10] sm:$0x1]
    %v2926 = vlaneseq
    %v2927 = vshrl.u32 %v2926, 7
    %v2928 = vsub.s32 0, %v2927
    %v2929 = vrot.slane %v2924, %v2928
    %v3006 = vunpack.c.l.b16 %v2849
    %v3007 = vunpack.c.l.b16 %v2850
    %v3008 = vunpack.c.l.b16 %v2851
    %v3009 = vunpack.c.l.b16 %v2852
    %v3010 = vunpack.c.l.b16 %v2853
    %v3011 = vunpack.c.l.b16 %v2854
    %v3012 = vunpack.c.l.b16 %v2855
    %v3013 = vunpack.c.l.b16 %v2856
    %v3014 = vunpack.c.l.b16 %v2857
    %v3015 = vunpack.c.l.b16 %v2858
    %v3016 = vunpack.c.l.b16 %v2859
    %v3017 = vunpack.c.l.b16 %v2860
    %v3018 = vunpack.c.l.b16 %v2861
    %v3019 = vunpack.c.l.b16 %v2862
    %v3020 = vunpack.c.l.b16 %v2863
    %v3021 = vunpack.c.l.b16 %v2864
    %v3022 = vunpack.c.l.b16 %v2865
    %v3023 = vunpack.c.l.b16 %v2866
    %v3024 = vunpack.c.l.b16 %v2867
    %v3025 = vunpack.c.l.b16 %v2868
    %v3026 = vunpack.c.l.b16 %v2869
    %v3027 = vunpack.c.l.b16 %v2870
    %v3028 = vunpack.c.l.b16 %v2871
    %v3029 = vunpack.c.l.b16 %v2872
    %v3030 = vunpack.c.l.b16 %v2873
    %v3031 = vunpack.c.l.b16 %v2874
    %v3032 = vunpack.c.l.b16 %v2875
    %v3033 = vunpack.c.l.b16 %v2876
    %v3034 = vunpack.c.l.b16 %v2877
    %v3035 = vunpack.c.l.b16 %v2878
    %v3036 = vunpack.c.l.b16 %v2879
    %v3037 = vunpack.c.l.b16 %v2880
    %v3038 = vunpack.c.l.b16 %v2881
    %v3039 = vunpack.c.l.b16 %v2882
    %v3040 = vunpack.c.l.b16 %v2883
    %v3041 = vunpack.c.l.b16 %v2884
    %v3042 = vunpack.c.l.b16 %v2885
    %v3043 = vunpack.c.l.b16 %v2886
    %v3044 = vunpack.c.l.b16 %v2887
    %v3045 = vunpack.c.l.b16 %v2888
    %v3046 = vunpack.c.l.b16 %v2889
    %v3047 = vunpack.c.l.b16 %v2890
    %v3048 = vunpack.c.l.b16 %v2891
    %v3049 = vunpack.c.l.b16 %v2892
    %v3050 = vunpack.c.l.b16 %v2893
    %v3051 = vunpack.c.l.b16 %v2894
    %v3052 = vunpack.c.l.b16 %v2895
    %v3053 = vunpack.c.l.b16 %v2896
    %v3054 = vunpack.c.l.b16 %v2897
    %v3055 = vunpack.c.l.b16 %v2898
    %v3056 = vunpack.c.l.b16 %v2899
    %v3057 = vunpack.c.l.b16 %v2900
    %v3058 = vunpack.c.l.b16 %v2901
    %v3059 = vunpack.c.l.b16 %v2902
    %v3060 = vunpack.c.l.b16 %v2903
    %v3061 = vunpack.c.l.b16 %v2904
    %v3062 = vunpack.c.l.b16 %v2905
    %v3063 = vunpack.c.l.b16 %v2906
    %v3064 = vunpack.c.l.b16 %v2907
    %v3065 = vunpack.c.l.b16 %v2908
    %v3066 = vunpack.c.l.b16 %v2909
    %v3067 = vunpack.c.l.b16 %v2910
    %v3068 = vunpack.c.l.b16 %v2911
    %v3069 = vunpack.c.l.b16 %v2912
    %v3070 = vunpack.c.l.b16 %v2913
    %v3071 = vunpack.c.l.b16 %v2914
    %v3072 = vunpack.c.l.b16 %v2915
    %v3073 = vunpack.c.l.b16 %v2916
    %v3074 = vunpack.c.l.b16 %v2917
    %v3075 = vunpack.c.l.b16 %v2918
    %v3076 = vunpack.c.l.b16 %v2919
    %v3077 = vunpack.c.l.b16 %v2920
    %v3078 = vunpack.c.l.b16 %v2921
    %v3079 = vunpack.c.l.b16 %v2922
    %v3080 = vunpack.c.l.b16 %v2923
    %v3081 = vpack.c.b16 %v3007, %v3006
    %v3082 = vpack.c.b16 %v3009, %v3008
    %v3083 = vpack.c.b16 %v3011, %v3010
    %v3084 = vpack.c.b16 %v3013, %v3012
    %v3085 = vpack.c.b16 %v3015, %v3014
    %v3086 = vpack.c.b16 %v3017, %v3016
    %v3087 = vpack.c.b16 %v3019, %v3018
    %v3088 = vpack.c.b16 %v3021, %v3020
    %v3089 = vpack.c.b16 %v3023, %v3022
    %v3090 = vpack.c.b16 %v3025, %v3024
    %v3091 = vpack.c.b16 %v3027, %v3026
    %v3092 = vpack.c.b16 %v3029, %v3028
    %v3093 = vpack.c.b16 %v3031, %v3030
    %v3094 = vpack.c.b16 %v3033, %v3032
    %v3095 = vpack.c.b16 %v3035, %v3034
    %v3096 = vpack.c.b16 %v3037, %v3036
    %v3097 = vpack.c.b16 %v3039, %v3038
    %v3098 = vpack.c.b16 %v3041, %v3040
    %v3099 = vpack.c.b16 %v3043, %v3042
    %v3100 = vpack.c.b16 %v3045, %v3044
    %v3101 = vpack.c.b16 %v3047, %v3046
    %v3102 = vpack.c.b16 %v3049, %v3048
    %v3103 = vpack.c.b16 %v3051, %v3050
    %v3104 = vpack.c.b16 %v3053, %v3052
    %v3105 = vpack.c.b16 %v3055, %v3054
    %v3106 = vpack.c.b16 %v3057, %v3056
    %v3107 = vpack.c.b16 %v3059, %v3058
    %v3108 = vpack.c.b16 %v3061, %v3060
    %v3109 = vpack.c.b16 %v3063, %v3062
    %v3110 = vpack.c.b16 %v3065, %v3064
    %v3111 = vpack.c.b16 %v3067, %v3066
    %v3112 = vpack.c.b16 %v3069, %v3068
    %v3113 = vpack.c.b16 %v3071, %v3070
    %v3114 = vpack.c.b16 %v3073, %v3072
    %v3115 = vpack.c.b16 %v3075, %v3074
    %v3116 = vpack.c.b16 %v3077, %v3076
    %v3117 = vpack.c.b16 %v3079, %v3078
    %v3118 = vpack.c.b16 %v3080, %v3080
    %vm3156 = vcmask 719872
    %v3158 = vsel %vm3156, %v2847, 0
    %vm3160 = vcmask 1043456
    %v3162 = vsel %vm3160, %v3118, 0
    %3164 = vmatprep.subr.bf16.mxu0 0
    %3165 = vmatpush1.bf16.msra.mxu0 %v3088
    %3166 = vmatprep.subr.bf16.mxu0 0
    %3167 = vmatpush1.bf16.msra.mxu0 %v3087
    %3168 = vmatprep.subr.bf16.mxu0 0
    %3169 = vmatpush1.bf16.msra.mxu0 %v3086
    %3170 = vmatprep.subr.bf16.mxu0 0
    %3171 = vmatpush1.bf16.msra.mxu0 %v3085
    %3172 = vmatprep.subr.bf16.mxu0 0
    %3173 = vmatpush1.bf16.msra.mxu0 %v3084
    %3174 = vmatprep.subr.bf16.mxu0 0
    %3175 = vmatpush1.bf16.msra.mxu0 %v3083
    %3176 = vmatprep.subr.bf16.mxu0 0
    %3177 = vmatpush1.bf16.msra.mxu0 %v3082
    %3178 = vmatprep.subr.bf16.mxu0 0
    %3179 = vmatpush1.bf16.msra.mxu0 %v3081
    %3180 = vmatprep.subr.bf16.mxu0 0
    %3181 = vmatpush2.bf16.msra.mxu0 %v3096
    %3182 = vmatprep.subr.bf16.mxu0 0
    %3183 = vmatpush2.bf16.msra.mxu0 %v3095
    %3184 = vmatprep.subr.bf16.mxu0 0
    %3185 = vmatpush2.bf16.msra.mxu0 %v3094
    %3186 = vmatprep.subr.bf16.mxu0 0
    %3187 = vmatpush2.bf16.msra.mxu0 %v3093
    %3188 = vmatprep.subr.bf16.mxu0 0
    %3189 = vmatpush2.bf16.msra.mxu0 %v3092
    %3190 = vmatprep.subr.bf16.mxu0 0
    %3191 = vmatpush2.bf16.msra.mxu0 %v3091
    %3192 = vmatprep.subr.bf16.mxu0 0
    %3193 = vmatpush2.bf16.msra.mxu0 %v3090
    %3194 = vmatprep.subr.bf16.mxu0 0
    %3195 = vmatpush2.bf16.msra.mxu0 %v3089
    %3196 = vmatprep.mubr.bf16.mxu0 %v2844
    %3197 = vmatmul.mubr.bf16.gmra.mxu0 %v2843
    %v3198 = vpop.f32.mrf.mxu0
    %v3199 = vadd.f32 %v2929, %v3198
    %v3200 = vpop.f32.mrf.mxu0
    %v3201 = vpop.f32.mrf.mxu0
    %v3202 = vpop.f32.mrf.mxu0
    %3203 = vdwg.mxu0
    %3204 = vmatprep.subr.bf16.mxu0 0
    %3205 = vmatpush1.bf16.msra.mxu0 %v3104
    %3206 = vmatprep.subr.bf16.mxu0 0
    %3207 = vmatpush1.bf16.msra.mxu0 %v3103
    %3208 = vmatprep.subr.bf16.mxu0 0
    %3209 = vmatpush1.bf16.msra.mxu0 %v3102
    %3210 = vmatprep.subr.bf16.mxu0 0
    %3211 = vmatpush1.bf16.msra.mxu0 %v3101
    %3212 = vmatprep.subr.bf16.mxu0 0
    %3213 = vmatpush1.bf16.msra.mxu0 %v3100
    %3214 = vmatprep.subr.bf16.mxu0 0
    %3215 = vmatpush1.bf16.msra.mxu0 %v3099
    %3216 = vmatprep.subr.bf16.mxu0 0
    %3217 = vmatpush1.bf16.msra.mxu0 %v3098
    %3218 = vmatprep.subr.bf16.mxu0 0
    %3219 = vmatpush1.bf16.msra.mxu0 %v3097
    %3220 = vmatprep.subr.bf16.mxu0 0
    %3221 = vmatpush2.bf16.msra.mxu0 %v3112
    %3222 = vmatprep.subr.bf16.mxu0 0
    %3223 = vmatpush2.bf16.msra.mxu0 %v3111
    %3224 = vmatprep.subr.bf16.mxu0 0
    %3225 = vmatpush2.bf16.msra.mxu0 %v3110
    %3226 = vmatprep.subr.bf16.mxu0 0
    %3227 = vmatpush2.bf16.msra.mxu0 %v3109
    %3228 = vmatprep.subr.bf16.mxu0 0
    %3229 = vmatpush2.bf16.msra.mxu0 %v3108
    %3230 = vmatprep.subr.bf16.mxu0 0
    %3231 = vmatpush2.bf16.msra.mxu0 %v3107
    %3232 = vmatprep.subr.bf16.mxu0 0
    %3233 = vmatpush2.bf16.msra.mxu0 %v3106
    %3234 = vmatprep.subr.bf16.mxu0 0
    %3235 = vmatpush2.bf16.msra.mxu0 %v3105
    %3236 = vmatprep.mubr.bf16.mxu0 %v2846
    %3237 = vmatmul.mubr.bf16.gmra.mxu0 %v2845
    %v3238 = vpop.f32.mrf.mxu0
    %v3239 = vadd.f32 %v3199, %v3238
    %v3240 = vpop.f32.mrf.mxu0
    %v3241 = vpop.f32.mrf.mxu0
    %v3242 = vpop.f32.mrf.mxu0
    %3243 = vdwg.mxu0
    %3244 = vmatprep.subr.bf16.mxu0 0
    %3245 = vmatpush1.bf16.msra.mxu0 0
    %3246 = vmatprep.subr.bf16.mxu0 0
    %3247 = vmatpush1.bf16.msra.mxu0 0
    %3248 = vmatprep.subr.bf16.mxu0 0
    %3249 = vmatpush1.bf16.msra.mxu0 %v3162
    %3250 = vmatprep.subr.bf16.mxu0 0
    %3251 = vmatpush1.bf16.msra.mxu0 %v3117
    %3252 = vmatprep.subr.bf16.mxu0 0
    %3253 = vmatpush1.bf16.msra.mxu0 %v3116
    %3254 = vmatprep.subr.bf16.mxu0 0
    %3255 = vmatpush1.bf16.msra.mxu0 %v3115
    %3256 = vmatprep.subr.bf16.mxu0 0
    %3257 = vmatpush1.bf16.msra.mxu0 %v3114
    %3258 = vmatprep.subr.bf16.mxu0 0
    %3259 = vmatpush1.bf16.msra.mxu0 %v3113
    %3260 = vmatprep.subr.bf16.mxu0 0
    %3261 = vmatpush2.bf16.msra.mxu0 0
    %3262 = vmatprep.subr.bf16.mxu0 0
    %3263 = vmatpush2.bf16.msra.mxu0 0
    %3264 = vmatprep.subr.bf16.mxu0 0
    %3265 = vmatpush2.bf16.msra.mxu0 0
    %3266 = vmatprep.subr.bf16.mxu0 0
    %3267 = vmatpush2.bf16.msra.mxu0 0
    %3268 = vmatprep.subr.bf16.mxu0 0
    %3269 = vmatpush2.bf16.msra.mxu0 0
    %3270 = vmatprep.subr.bf16.mxu0 0
    %3271 = vmatpush2.bf16.msra.mxu0 0
    %3272 = vmatprep.subr.bf16.mxu0 0
    %3273 = vmatpush2.bf16.msra.mxu0 0
    %3274 = vmatprep.subr.bf16.mxu0 0
    %3275 = vmatpush2.bf16.msra.mxu0 0
    %3276 = vmatprep.mubr.bf16.mxu0 0
    %3277 = vmatmul.mubr.bf16.gmra.mxu0 %v3158
    %v3278 = vpop.f32.mrf.mxu0
    %v3279 = vadd.f32 %v3239, %v3278
    %v3280 = vpop.f32.mrf.mxu0
    %v3281 = vpop.f32.mrf.mxu0
    %v3282 = vpop.f32.mrf.mxu0
    %3283 = vdwg.mxu0
    %v3284 = vadd.f32 %v2848, 1e-07
    %v3285 = vsub.f32 1.0, %v2848
    %v3286 = vadd.f32 %v3285, 1e-07
    %v3287 = vrcp.pop %v3286
    %v3288 = vmul.f32 %v3284, %v3287
    %v3289 = vlog2.pop %v3288
    %v3290 = vmul.f32 %v3289, 0.6931472
    %v3291 = vstv %s57
    %v3292 = vadd.f32 %v3291, %v3290
    %v3293 = vmul.f32 %v3292, 5.0
    %v3294 = vtanh.pop %v3293
    %v3295 = vmul.f32 %v3294, 0.5
    %v3296 = vsub.f32 0.5, %v3295
    %v3297 = vmul.f32 %v3279, %v3296
    %v3298 = vstv %s58
    %v3299 = vmul.f32 %v3297, %v3298
    %v3300 = vmax.f32 %v3299, 0.0
    %v3301 = vlaneseq
    %v3302 = vand.u32 %v3301, 127
    %vm3303 = vcmp.lt.s32.totalorder %v3302, 10
    %v3304 = vsel %vm3303, %v3300, -1e+30
    %3305 = vmax.xlane.f32.xlu0 %v3304
    %v3306 = vpop.xlane.xlu0 %3305
    %v3307 = vsub.f32 %v3304, %v3306
    %v3308 = vmul.f32 %v3307, 1.442695
    %v3309 = vpow.pop %v3308
    %3310 = vadd.xlane.f32.xlu0 %v3309
    %v3311 = vpop.xlane.xlu0 %3310
    %v3312 = vlog2.pop %v3311
    %v3313 = vmul.f32 %v3312, 0.6931472
    %v3314 = vadd.f32 %v3313, %v3306
    %v3315 = vsub.f32 %v3304, %v3314
    %3316 = vst [vmem:[#allocation5] sm:$0xff] %v3315
    // Predicated region
    $region50: #{tpu_custom_call.1} parent=1 // pred_check
      _
    $region51: #{tpu_custom_call.1} parent=1 // pred_check_branch
      %3318 = sbr.rel (0) target = $region53
    $region52: #{tpu_custom_call.1} parent=1 // pred_region
      %s3320 = ssub.s32 128, 128
      %3321 = vsyncadd [#allocation3], %s3320
      %s3323 = sshll.u32 [#allocation5], 4
      %s3324 = int_to_ptr.vmem [resolvable:$true] %s3323
      %3326 = dma.vmem_to_hbm [thread:$0]  %s3324, 128, %s11, [#allocation3]
    $region53: #{tpu_custom_call.1} parent=1 // pred_fallthru
      _
    // Predicated region
    $region54: #{tpu_custom_call.1} parent=1 // pred_check
      _
    $region55: #{tpu_custom_call.1} parent=1 // pred_check_branch
      %3328 = sbr.rel (0) target = $region57
    $region56: #{tpu_custom_call.1} parent=1 // pred_region
      %3329 = dma.done [#allocation3], 128
    $region57: #{tpu_custom_call.1} parent=1 // pred_fallthru
      _
    %3330 = vsyncpa [#allocation3], 1
    %3331 = vsyncpa [#allocation4], 1

</llo_original>
